<compile_context>
chip_gen: v6e
topology: v6e:2x2x1
jax: 0.10.0
libtpu: 0.0.40
codegen_flags: <defaults>
</compile_context>

<pallas_src>
import functools
import math

import numpy as np

import jax
import jax.numpy as jnp
from jax.experimental import pallas as pl
from jax.experimental.pallas import tpu as pltpu


_VMEM = pl.BlockSpec(memory_space=pltpu.MemorySpace.VMEM)


# ----------------------------------------------------------------------------
# Fused whole-model kernel
# ----------------------------------------------------------------------------
def fused_transformer_kernel(
    x_ref,                       # (R, D)        f32, seq-major rows (r = s*B + b)
    colmask_ref,                 # (H*R, SEG)    bf16: 1 on head-h columns, else 0
    bmask_ref,                   # (R, H*R)      f32:  0 same-batch, -1e30 cross-batch
    bones_ref,                   # (H*R, H*R)    f32:  block-of-ones (per-head segments)
    wqkv_ref,                    # (L, D, 3*SEG) bf16 (wq|wk|wv, each lane-padded to SEG)
    bqkv_ref,                    # (L, 1, 3*SEG) f32
    wo_ref,                      # (L, SEG, D)   bf16 (rows >= D are zero)
    bo_ref,                      # (L, 1, D)     f32
    ln1g_ref, ln1b_ref,          # (L, 1, D)     f32
    w1_ref,                      # (L, D, Dh)    bf16
    b1_ref,                      # (L, 1, Dh)    f32
    w2_ref,                      # (L, Dh, D)    bf16
    b2_ref,                      # (L, 1, D)     f32
    ln2g_ref, ln2b_ref,          # (L, 1, D)     f32
    decw_ref,                    # (D, Npad)     bf16 (zero-padded past n_out)
    decb_ref,                    # (1, Npad)     f32
    o_ref,                       # (R, Npad)     f32, lane-dense output
    *, nlayers, nhead, seg, eps=1e-5):
    bf16 = jnp.bfloat16
    f32 = jnp.float32
    R, d_model = x_ref.shape
    hd = d_model // nhead
    scale = 1.0 / math.sqrt(hd)

    def layernorm(y, g, b):
        mean = jnp.mean(y, axis=-1, keepdims=True)
        c = y - mean
        var = jnp.mean(c * c, axis=-1, keepdims=True)
        return c * jax.lax.rsqrt(var + eps) * g + b

    colmask = colmask_ref[...]           # (H*R, SEG) bf16, hoisted out of the layer loop
    bmask = bmask_ref[...]               # (R, H*R)   f32
    bones = bones_ref[...]               # (H*R, H*R) f32

    x = x_ref[...].astype(f32)           # (R, D), VMEM/vreg-resident for the whole kernel

    for l in range(nlayers):             # static, L = 2
        # ---- fused Q/K/V projection; segments are 128-lane aligned views ----
        qkv = jnp.dot(x.astype(bf16), wqkv_ref[l],
                      preferred_element_type=f32) + bqkv_ref[l]        # (R, 3*SEG)
        qkv_bf = qkv.astype(bf16)                                       # cast once
        q = qkv_bf[:, 0:seg]                                            # (R, SEG) aligned
        k = qkv_bf[:, seg:2 * seg]
        v = qkv_bf[:, 2 * seg:3 * seg]

        # ---- head-expanded K / V (rows h*R + r <-> (head h, token r)) ----
        kx = jnp.concatenate([k] * nhead, axis=0) * colmask             # (H*R, SEG)
        vx = jnp.concatenate([v] * nhead, axis=0) * colmask             # (H*R, SEG)

        # ---- all batches + all heads in ONE scores matmul ----
        scores = jax.lax.dot_general(
            q, kx, dimension_numbers=(((1,), (1,)), ((), ())),
            preferred_element_type=f32) * scale + bmask                 # (R, H*R)

        # per-row max is a valid shift for every per-head block; cross-batch
        # entries (score ~ -1e30) underflow to exactly 0 after exp.
        m = jnp.max(scores, axis=-1, keepdims=True)
        p = jnp.exp(scores - m)                                          # f32, EUP
        # exact per-head-block sums, broadcast back to every column of the block
        denom = jnp.dot(p, bones, preferred_element_type=f32)           # (R, H*R)
        p = p * pl.reciprocal(denom, approx=False)                       # exact softmax

        attn_seg = jnp.dot(p.astype(bf16), vx,
                           preferred_element_type=f32)                   # (R, SEG)
        attn_out = jnp.dot(attn_seg.astype(bf16), wo_ref[l],
                           preferred_element_type=f32) + bo_ref[l]       # (R, D)

        # post-LN residual (PyTorch norm_first=False), f32 elementwise
        x = layernorm(x + attn_out, ln1g_ref[l], ln1b_ref[l])

        # ---- feed-forward (ReLU, TransformerEncoderLayer default) ----
        ff = jnp.dot(x.astype(bf16), w1_ref[l],
                     preferred_element_type=f32) + b1_ref[l]
        ff = jnp.maximum(ff, 0.0)
        ff = jnp.dot(ff.astype(bf16), w2_ref[l],
                     preferred_element_type=f32) + b2_ref[l]
        x = layernorm(x + ff, ln2g_ref[l], ln2b_ref[l])

    # ---- decoder, lane-dense (Npad = 128) output, one unmasked store ----
    out = jnp.dot(x.astype(bf16), decw_ref[...],
                  preferred_element_type=f32) + decb_ref[...]
    o_ref[...] = out.astype(o_ref.dtype)


# ----------------------------------------------------------------------------
# Precomputed attention constants (head column mask, batch mask, block-ones)
# ----------------------------------------------------------------------------
def make_attention_constants(seq, batch, nhead, d_model, seg):
    R = seq * batch
    hd = d_model // nhead

    rows = np.arange(nhead * R)
    h_of_row = rows // R
    cols = np.arange(seg)
    colmask = ((cols[None, :] >= h_of_row[:, None] * hd)
               & (cols[None, :] < (h_of_row[:, None] + 1) * hd)).astype(np.float32)

    r = np.arange(R)                       # seq-major rows: batch(r) = r % batch
    same_b = (r[:, None] % batch) == (r[None, :] % batch)
    bmask = np.where(same_b, 0.0, -1e30).astype(np.float32)
    bmask = np.tile(bmask, (1, nhead))     # (R, H*R)

    blk = np.arange(nhead * R) // R
    bones = (blk[:, None] == blk[None, :]).astype(np.float32)  # (H*R, H*R)

    return (jnp.asarray(colmask, jnp.bfloat16),
            jnp.asarray(bmask, jnp.float32),
            jnp.asarray(bones, jnp.float32))


# ----------------------------------------------------------------------------
# Parameters (layer weights stacked on a leading L axis; QKV fused + lane-padded)
# ----------------------------------------------------------------------------
def init_params(key, d_model, nhead, d_hid, nlayers, n_out, seg, n_out_pad):
    def uni(k, shape, bound):
        return jax.random.uniform(k, shape, jnp.float32, -bound, bound)

    keys = jax.random.split(key, nlayers + 1)
    b_attn = 1.0 / math.sqrt(d_model)
    b_ff1 = 1.0 / math.sqrt(d_model)
    b_ff2 = 1.0 / math.sqrt(d_hid)
    lane_pad = ((0, 0), (0, seg - d_model))

    wqkv, wo, w1, w2 = [], [], [], []
    for i in range(nlayers):
        k0, k1, k2, k3, k4, k5 = jax.random.split(keys[i], 6)
        wq = jnp.pad(uni(k0, (d_model, d_model), b_attn), lane_pad)
        wk = jnp.pad(uni(k1, (d_model, d_model), b_attn), lane_pad)
        wv = jnp.pad(uni(k2, (d_model, d_model), b_attn), lane_pad)
        wqkv.append(jnp.concatenate([wq, wk, wv], axis=1))              # (D, 3*SEG)
        wo.append(jnp.pad(uni(k3, (d_model, d_model), b_attn),
                          ((0, seg - d_model), (0, 0))))                # (SEG, D)
        w1.append(uni(k4, (d_model, d_hid), b_ff1))
        w2.append(uni(k5, (d_hid, d_model), b_ff2))

    L = nlayers
    params = dict(
        wqkv=jnp.stack(wqkv).astype(jnp.bfloat16),
        bqkv=jnp.zeros((L, 1, 3 * seg), jnp.float32),
        wo=jnp.stack(wo).astype(jnp.bfloat16),
        bo=jnp.zeros((L, 1, d_model), jnp.float32),
        ln1_g=jnp.ones((L, 1, d_model), jnp.float32),
        ln1_b=jnp.zeros((L, 1, d_model), jnp.float32),
        w1=jnp.stack(w1).astype(jnp.bfloat16),
        b1=jnp.zeros((L, 1, d_hid), jnp.float32),
        w2=jnp.stack(w2).astype(jnp.bfloat16),
        b2=jnp.zeros((L, 1, d_model), jnp.float32),
        ln2_g=jnp.ones((L, 1, d_model), jnp.float32),
        ln2_b=jnp.zeros((L, 1, d_model), jnp.float32),
    )
    # decoder: weight uniform(-0.1, 0.1), bias zero (matches init_weights);
    # zero-padded to a lane-dense width.
    dec_w = uni(keys[-1], (d_model, n_out), 0.1)
    params["dec_w"] = jnp.pad(dec_w, ((0, 0), (0, n_out_pad - n_out))).astype(jnp.bfloat16)
    params["dec_b"] = jnp.zeros((1, n_out_pad), jnp.float32)
    return params


# ----------------------------------------------------------------------------
# Forward wrapper (minimal layout plumbing outside, all compute in ONE pallas_call)
# ----------------------------------------------------------------------------
def my_transformer_forward(src, params, consts, nhead, n_out):
    # src: (S, B, D) -> out: (S, B, n_out).  Kernel uses seq-major rows (s*B+b),
    # so no transposes are needed around the call.
    S, B, D = src.shape
    R = S * B
    L = params["wqkv"].shape[0]
    seg = params["wo"].shape[1]
    d_hid = params["w1"].shape[2]
    n_out_pad = params["dec_w"].shape[1]

    x = src.reshape(R, D)
    colmask, bmask, bones = consts

    inputs = (
        x, colmask, bmask, bones,
        params["wqkv"], params["bqkv"],
        params["wo"], params["bo"],
        params["ln1_g"], params["ln1_b"],
        params["w1"], params["b1"],
        params["w2"], params["b2"],
        params["ln2_g"], params["ln2_b"],
        params["dec_w"], params["dec_b"],
    )

    # advisory cost estimate for XLA's scheduler
    HR = nhead * R
    flops_per_layer = (2 * R * D * (3 * seg) + 2 * R * seg * HR + 2 * R * HR * HR
                       + 2 * R * HR * seg + 2 * R * seg * D
                       + 2 * R * D * d_hid + 2 * R * d_hid * D)
    flops = L * flops_per_layer + 2 * R * D * n_out_pad
    transcendentals = L * (2 * R * HR + 2 * R)
    bytes_accessed = (sum(int(a.size) * a.dtype.itemsize for a in inputs)
                      + R * n_out_pad * 4)

    kernel = functools.partial(fused_transformer_kernel,
                               nlayers=L, nhead=nhead, seg=seg)

    out_pad = pl.pallas_call(
        kernel,
        out_shape=jax.ShapeDtypeStruct((R, n_out_pad), jnp.float32),
        in_specs=[_VMEM] * len(inputs),
        out_specs=_VMEM,
        cost_estimate=pl.CostEstimate(flops=flops,
                                      transcendentals=transcendentals,
                                      bytes_accessed=bytes_accessed),
    )(*inputs)

    return out_pad[:, :n_out].reshape(S, B, n_out)


# ----------------------------------------------------------------------------
if __name__ == "__main__":
    # small config consistent with MyTransformer(output, d_model, nhead, d_hid, nlayers)
    SEQ, BATCH = 8, 2
    D_MODEL, NHEAD, D_HID, NLAYERS, N_OUT = 32, 4, 64, 2, 10
    SEG = 128        # lane-aligned Q/K/V segment width
    N_OUT_PAD = 128  # lane-dense kernel output; sliced back to N_OUT in the wrapper

    key = jax.random.PRNGKey(0)
    k_param, k_src = jax.random.split(key)

    params = init_params(k_param, D_MODEL, NHEAD, D_HID, NLAYERS, N_OUT, SEG, N_OUT_PAD)
    consts = make_attention_constants(SEQ, BATCH, NHEAD, D_MODEL, SEG)
    src = jax.random.normal(k_src, (SEQ, BATCH, D_MODEL), dtype=jnp.float32)

    fwd = jax.jit(functools.partial(my_transformer_forward, nhead=NHEAD, n_out=N_OUT))
    out = jax.block_until_ready(fwd(src, params, consts))

    assert out.shape == (SEQ, BATCH, N_OUT), out.shape
    assert bool(jnp.all(jnp.isfinite(out)))
    print("KERNEL_OK")
</pallas_src>

<mosaic_0001>
module attributes {stable_mosaic.version = 11 : i64} {
  func.func @fused_transformer_kernel(%arg0: memref<16x32xf32, #tpu.memory_space<vmem>>, %arg1: memref<64x128xbf16, #tpu.memory_space<vmem>>, %arg2: memref<16x64xf32, #tpu.memory_space<vmem>>, %arg3: memref<64x64xf32, #tpu.memory_space<vmem>>, %arg4: memref<2x32x384xbf16, #tpu.memory_space<vmem>>, %arg5: memref<2x1x384xf32, #tpu.memory_space<vmem>>, %arg6: memref<2x128x32xbf16, #tpu.memory_space<vmem>>, %arg7: memref<2x1x32xf32, #tpu.memory_space<vmem>>, %arg8: memref<2x1x32xf32, #tpu.memory_space<vmem>>, %arg9: memref<2x1x32xf32, #tpu.memory_space<vmem>>, %arg10: memref<2x32x64xbf16, #tpu.memory_space<vmem>>, %arg11: memref<2x1x64xf32, #tpu.memory_space<vmem>>, %arg12: memref<2x64x32xbf16, #tpu.memory_space<vmem>>, %arg13: memref<2x1x32xf32, #tpu.memory_space<vmem>>, %arg14: memref<2x1x32xf32, #tpu.memory_space<vmem>>, %arg15: memref<2x1x32xf32, #tpu.memory_space<vmem>>, %arg16: memref<32x128xbf16, #tpu.memory_space<vmem>>, %arg17: memref<1x128xf32, #tpu.memory_space<vmem>>, %arg18: memref<16x128xf32, #tpu.memory_space<vmem>>) attributes {dimension_semantics = [], scalar_prefetch = 0 : i64, scratch_operands = 0 : i64, tpu.core_type = #tpu.core_type<tc>} {
    %c0 = arith.constant 0 : index
    %c0_0 = arith.constant 0 : index
    %0 = vector.load %arg1[%c0, %c0_0] : memref<64x128xbf16, #tpu.memory_space<vmem>>, vector<64x128xbf16>
    %c0_1 = arith.constant 0 : index
    %c0_2 = arith.constant 0 : index
    %1 = vector.load %arg2[%c0_1, %c0_2] : memref<16x64xf32, #tpu.memory_space<vmem>>, vector<16x64xf32>
    %c0_3 = arith.constant 0 : index
    %c0_4 = arith.constant 0 : index
    %2 = vector.load %arg3[%c0_3, %c0_4] : memref<64x64xf32, #tpu.memory_space<vmem>>, vector<64x64xf32>
    %c0_5 = arith.constant 0 : index
    %c0_6 = arith.constant 0 : index
    %3 = vector.load %arg0[%c0_5, %c0_6] : memref<16x32xf32, #tpu.memory_space<vmem>>, vector<16x32xf32>
    %4 = arith.truncf %3 : vector<16x32xf32> to vector<16x32xbf16>
    %c0_7 = arith.constant 0 : index
    %c0_8 = arith.constant 0 : index
    %c0_9 = arith.constant 0 : index
    %5 = vector.load %arg4[%c0_7, %c0_8, %c0_9] : memref<2x32x384xbf16, #tpu.memory_space<vmem>>, vector<1x32x384xbf16>
    %6 = vector.shape_cast %5 : vector<1x32x384xbf16> to vector<32x384xbf16>
    %cst = arith.constant dense<0.000000e+00> : vector<16x384xf32>
    %7 = tpu.matmul %4, %6, %cst {dimension_numbers = #tpu.dot_dimension_numbers<[1], [0], [0], [1], [0, 0, 1, 1], [], []>} : vector<16x32xbf16>, vector<32x384xbf16>, vector<16x384xf32> -> vector<16x384xf32>
    %c0_10 = arith.constant 0 : index
    %c0_11 = arith.constant 0 : index
    %c0_12 = arith.constant 0 : index
    %8 = vector.load %arg5[%c0_10, %c0_11, %c0_12] : memref<2x1x384xf32, #tpu.memory_space<vmem>>, vector<1x1x384xf32>
    %9 = vector.shape_cast %8 : vector<1x1x384xf32> to vector<1x384xf32>
    %10 = vector.broadcast %9 : vector<1x384xf32> to vector<16x384xf32>
    %11 = arith.addf %7, %10 : vector<16x384xf32>
    %12 = arith.truncf %11 : vector<16x384xf32> to vector<16x384xbf16>
    %13 = vector.extract_strided_slice %12 {offsets = [0, 0], sizes = [16, 128], strides = [1, 1]} : vector<16x384xbf16> to vector<16x128xbf16>
    %14 = vector.extract_strided_slice %12 {offsets = [0, 128], sizes = [16, 128], strides = [1, 1]} : vector<16x384xbf16> to vector<16x128xbf16>
    %15 = vector.extract_strided_slice %12 {offsets = [0, 256], sizes = [16, 128], strides = [1, 1]} : vector<16x384xbf16> to vector<16x128xbf16>
    %16 = tpu.concatenate %14, %14, %14, %14 in 0 : vector<16x128xbf16>, vector<16x128xbf16>, vector<16x128xbf16>, vector<16x128xbf16> -> vector<64x128xbf16>
    %17 = arith.mulf %16, %0 : vector<64x128xbf16>
    %18 = tpu.concatenate %15, %15, %15, %15 in 0 : vector<16x128xbf16>, vector<16x128xbf16>, vector<16x128xbf16>, vector<16x128xbf16> -> vector<64x128xbf16>
    %19 = arith.mulf %18, %0 : vector<64x128xbf16>
    %cst_13 = arith.constant dense<0.000000e+00> : vector<16x64xf32>
    %20 = tpu.matmul %13, %17, %cst_13 {dimension_numbers = #tpu.dot_dimension_numbers<[1], [1], [0], [0], [0, 0, 1, 0], [], []>} : vector<16x128xbf16>, vector<64x128xbf16>, vector<16x64xf32> -> vector<16x64xf32>
    %cst_14 = arith.constant 0.353553385 : f32
    %21 = vector.broadcast %cst_14 : f32 to vector<16x64xf32>
    %22 = arith.mulf %20, %21 : vector<16x64xf32>
    %23 = arith.addf %22, %1 : vector<16x64xf32>
    %cst_15 = arith.constant dense<0xFF800000> : vector<16xf32>
    %24 = vector.multi_reduction <maximumf>, %23, %cst_15 [1] : vector<16x64xf32> to vector<16xf32>
    %25 = vector.shape_cast %24 : vector<16xf32> to vector<16x1xf32>
    %26 = vector.broadcast %25 : vector<16x1xf32> to vector<16x64xf32>
    %27 = arith.subf %23, %26 : vector<16x64xf32>
    %28 = math.exp %27 : vector<16x64xf32>
    %cst_16 = arith.constant dense<0.000000e+00> : vector<16x64xf32>
    %29 = tpu.matmul %28, %2, %cst_16 {dimension_numbers = #tpu.dot_dimension_numbers<[1], [0], [0], [1], [0, 0, 1, 1], [], []>} : vector<16x64xf32>, vector<64x64xf32>, vector<16x64xf32> -> vector<16x64xf32>
    %30 = tpu.reciprocal %29 : vector<16x64xf32> -> vector<16x64xf32>
    %31 = arith.mulf %28, %30 : vector<16x64xf32>
    %32 = arith.truncf %31 : vector<16x64xf32> to vector<16x64xbf16>
    %cst_17 = arith.constant dense<0.000000e+00> : vector<16x128xf32>
    %33 = tpu.matmul %32, %19, %cst_17 {dimension_numbers = #tpu.dot_dimension_numbers<[1], [0], [0], [1], [0, 0, 1, 1], [], []>} : vector<16x64xbf16>, vector<64x128xbf16>, vector<16x128xf32> -> vector<16x128xf32>
    %34 = arith.truncf %33 : vector<16x128xf32> to vector<16x128xbf16>
    %c0_18 = arith.constant 0 : index
    %c0_19 = arith.constant 0 : index
    %c0_20 = arith.constant 0 : index
    %35 = vector.load %arg6[%c0_18, %c0_19, %c0_20] : memref<2x128x32xbf16, #tpu.memory_space<vmem>>, vector<1x128x32xbf16>
    %36 = vector.shape_cast %35 : vector<1x128x32xbf16> to vector<128x32xbf16>
    %cst_21 = arith.constant dense<0.000000e+00> : vector<16x32xf32>
    %37 = tpu.matmul %34, %36, %cst_21 {dimension_numbers = #tpu.dot_dimension_numbers<[1], [0], [0], [1], [0, 0, 1, 1], [], []>} : vector<16x128xbf16>, vector<128x32xbf16>, vector<16x32xf32> -> vector<16x32xf32>
    %c0_22 = arith.constant 0 : index
    %c0_23 = arith.constant 0 : index
    %c0_24 = arith.constant 0 : index
    %38 = vector.load %arg7[%c0_22, %c0_23, %c0_24] : memref<2x1x32xf32, #tpu.memory_space<vmem>>, vector<1x1x32xf32>
    %39 = vector.shape_cast %38 : vector<1x1x32xf32> to vector<1x32xf32>
    %40 = vector.broadcast %39 : vector<1x32xf32> to vector<16x32xf32>
    %41 = arith.addf %37, %40 : vector<16x32xf32>
    %42 = arith.addf %3, %41 : vector<16x32xf32>
    %c0_25 = arith.constant 0 : index
    %c0_26 = arith.constant 0 : index
    %c0_27 = arith.constant 0 : index
    %43 = vector.load %arg8[%c0_25, %c0_26, %c0_27] : memref<2x1x32xf32, #tpu.memory_space<vmem>>, vector<1x1x32xf32>
    %44 = vector.shape_cast %43 : vector<1x1x32xf32> to vector<1x32xf32>
    %c0_28 = arith.constant 0 : index
    %c0_29 = arith.constant 0 : index
    %c0_30 = arith.constant 0 : index
    %45 = vector.load %arg9[%c0_28, %c0_29, %c0_30] : memref<2x1x32xf32, #tpu.memory_space<vmem>>, vector<1x1x32xf32>
    %46 = vector.shape_cast %45 : vector<1x1x32xf32> to vector<1x32xf32>
    %cst_31 = arith.constant dense<0.000000e+00> : vector<16xf32>
    %47 = vector.multi_reduction <add>, %42, %cst_31 [1] : vector<16x32xf32> to vector<16xf32>
    %48 = vector.shape_cast %47 : vector<16xf32> to vector<16x1xf32>
    %cst_32 = arith.constant 3.200000e+01 : f32
    %49 = vector.broadcast %cst_32 : f32 to vector<16x1xf32>
    %50 = arith.divf %48, %49 : vector<16x1xf32>
    %51 = vector.broadcast %50 : vector<16x1xf32> to vector<16x32xf32>
    %52 = arith.subf %42, %51 : vector<16x32xf32>
    %53 = arith.mulf %52, %52 : vector<16x32xf32>
    %cst_33 = arith.constant dense<0.000000e+00> : vector<16xf32>
    %54 = vector.multi_reduction <add>, %53, %cst_33 [1] : vector<16x32xf32> to vector<16xf32>
    %55 = vector.shape_cast %54 : vector<16xf32> to vector<16x1xf32>
    %cst_34 = arith.constant 3.200000e+01 : f32
    %56 = vector.broadcast %cst_34 : f32 to vector<16x1xf32>
    %57 = arith.divf %55, %56 : vector<16x1xf32>
    %cst_35 = arith.constant 9.99999974E-6 : f32
    %58 = vector.broadcast %cst_35 : f32 to vector<16x1xf32>
    %59 = arith.addf %57, %58 : vector<16x1xf32>
    %60 = math.rsqrt %59 : vector<16x1xf32>
    %61 = vector.broadcast %60 : vector<16x1xf32> to vector<16x32xf32>
    %62 = arith.mulf %52, %61 : vector<16x32xf32>
    %63 = vector.broadcast %44 : vector<1x32xf32> to vector<16x32xf32>
    %64 = arith.mulf %62, %63 : vector<16x32xf32>
    %65 = vector.broadcast %46 : vector<1x32xf32> to vector<16x32xf32>
    %66 = arith.addf %64, %65 : vector<16x32xf32>
    %67 = arith.truncf %66 : vector<16x32xf32> to vector<16x32xbf16>
    %c0_36 = arith.constant 0 : index
    %c0_37 = arith.constant 0 : index
    %c0_38 = arith.constant 0 : index
    %68 = vector.load %arg10[%c0_36, %c0_37, %c0_38] : memref<2x32x64xbf16, #tpu.memory_space<vmem>>, vector<1x32x64xbf16>
    %69 = vector.shape_cast %68 : vector<1x32x64xbf16> to vector<32x64xbf16>
    %cst_39 = arith.constant dense<0.000000e+00> : vector<16x64xf32>
    %70 = tpu.matmul %67, %69, %cst_39 {dimension_numbers = #tpu.dot_dimension_numbers<[1], [0], [0], [1], [0, 0, 1, 1], [], []>} : vector<16x32xbf16>, vector<32x64xbf16>, vector<16x64xf32> -> vector<16x64xf32>
    %c0_40 = arith.constant 0 : index
    %c0_41 = arith.constant 0 : index
    %c0_42 = arith.constant 0 : index
    %71 = vector.load %arg11[%c0_40, %c0_41, %c0_42] : memref<2x1x64xf32, #tpu.memory_space<vmem>>, vector<1x1x64xf32>
    %72 = vector.shape_cast %71 : vector<1x1x64xf32> to vector<1x64xf32>
    %73 = vector.broadcast %72 : vector<1x64xf32> to vector<16x64xf32>
    %74 = arith.addf %70, %73 : vector<16x64xf32>
    %cst_43 = arith.constant 0.000000e+00 : f32
    %75 = vector.broadcast %cst_43 : f32 to vector<16x64xf32>
    %76 = arith.maximumf %74, %75 : vector<16x64xf32>
    %77 = arith.truncf %76 : vector<16x64xf32> to vector<16x64xbf16>
    %c0_44 = arith.constant 0 : index
    %c0_45 = arith.constant 0 : index
    %c0_46 = arith.constant 0 : index
    %78 = vector.load %arg12[%c0_44, %c0_45, %c0_46] : memref<2x64x32xbf16, #tpu.memory_space<vmem>>, vector<1x64x32xbf16>
    %79 = vector.shape_cast %78 : vector<1x64x32xbf16> to vector<64x32xbf16>
    %cst_47 = arith.constant dense<0.000000e+00> : vector<16x32xf32>
    %80 = tpu.matmul %77, %79, %cst_47 {dimension_numbers = #tpu.dot_dimension_numbers<[1], [0], [0], [1], [0, 0, 1, 1], [], []>} : vector<16x64xbf16>, vector<64x32xbf16>, vector<16x32xf32> -> vector<16x32xf32>
    %c0_48 = arith.constant 0 : index
    %c0_49 = arith.constant 0 : index
    %c0_50 = arith.constant 0 : index
    %81 = vector.load %arg13[%c0_48, %c0_49, %c0_50] : memref<2x1x32xf32, #tpu.memory_space<vmem>>, vector<1x1x32xf32>
    %82 = vector.shape_cast %81 : vector<1x1x32xf32> to vector<1x32xf32>
    %83 = vector.broadcast %82 : vector<1x32xf32> to vector<16x32xf32>
    %84 = arith.addf %80, %83 : vector<16x32xf32>
    %85 = arith.addf %66, %84 : vector<16x32xf32>
    %c0_51 = arith.constant 0 : index
    %c0_52 = arith.constant 0 : index
    %c0_53 = arith.constant 0 : index
    %86 = vector.load %arg14[%c0_51, %c0_52, %c0_53] : memref<2x1x32xf32, #tpu.memory_space<vmem>>, vector<1x1x32xf32>
    %87 = vector.shape_cast %86 : vector<1x1x32xf32> to vector<1x32xf32>
    %c0_54 = arith.constant 0 : index
    %c0_55 = arith.constant 0 : index
    %c0_56 = arith.constant 0 : index
    %88 = vector.load %arg15[%c0_54, %c0_55, %c0_56] : memref<2x1x32xf32, #tpu.memory_space<vmem>>, vector<1x1x32xf32>
    %89 = vector.shape_cast %88 : vector<1x1x32xf32> to vector<1x32xf32>
    %cst_57 = arith.constant dense<0.000000e+00> : vector<16xf32>
    %90 = vector.multi_reduction <add>, %85, %cst_57 [1] : vector<16x32xf32> to vector<16xf32>
    %91 = vector.shape_cast %90 : vector<16xf32> to vector<16x1xf32>
    %cst_58 = arith.constant 3.200000e+01 : f32
    %92 = vector.broadcast %cst_58 : f32 to vector<16x1xf32>
    %93 = arith.divf %91, %92 : vector<16x1xf32>
    %94 = vector.broadcast %93 : vector<16x1xf32> to vector<16x32xf32>
    %95 = arith.subf %85, %94 : vector<16x32xf32>
    %96 = arith.mulf %95, %95 : vector<16x32xf32>
    %cst_59 = arith.constant dense<0.000000e+00> : vector<16xf32>
    %97 = vector.multi_reduction <add>, %96, %cst_59 [1] : vector<16x32xf32> to vector<16xf32>
    %98 = vector.shape_cast %97 : vector<16xf32> to vector<16x1xf32>
    %cst_60 = arith.constant 3.200000e+01 : f32
    %99 = vector.broadcast %cst_60 : f32 to vector<16x1xf32>
    %100 = arith.divf %98, %99 : vector<16x1xf32>
    %cst_61 = arith.constant 9.99999974E-6 : f32
    %101 = vector.broadcast %cst_61 : f32 to vector<16x1xf32>
    %102 = arith.addf %100, %101 : vector<16x1xf32>
    %103 = math.rsqrt %102 : vector<16x1xf32>
    %104 = vector.broadcast %103 : vector<16x1xf32> to vector<16x32xf32>
    %105 = arith.mulf %95, %104 : vector<16x32xf32>
    %106 = vector.broadcast %87 : vector<1x32xf32> to vector<16x32xf32>
    %107 = arith.mulf %105, %106 : vector<16x32xf32>
    %108 = vector.broadcast %89 : vector<1x32xf32> to vector<16x32xf32>
    %109 = arith.addf %107, %108 : vector<16x32xf32>
    %110 = arith.truncf %109 : vector<16x32xf32> to vector<16x32xbf16>
    %c1 = arith.constant 1 : index
    %c0_62 = arith.constant 0 : index
    %c0_63 = arith.constant 0 : index
    %111 = vector.load %arg4[%c1, %c0_62, %c0_63] : memref<2x32x384xbf16, #tpu.memory_space<vmem>>, vector<1x32x384xbf16>
    %112 = vector.shape_cast %111 : vector<1x32x384xbf16> to vector<32x384xbf16>
    %cst_64 = arith.constant dense<0.000000e+00> : vector<16x384xf32>
    %113 = tpu.matmul %110, %112, %cst_64 {dimension_numbers = #tpu.dot_dimension_numbers<[1], [0], [0], [1], [0, 0, 1, 1], [], []>} : vector<16x32xbf16>, vector<32x384xbf16>, vector<16x384xf32> -> vector<16x384xf32>
    %c1_65 = arith.constant 1 : index
    %c0_66 = arith.constant 0 : index
    %c0_67 = arith.constant 0 : index
    %114 = vector.load %arg5[%c1_65, %c0_66, %c0_67] : memref<2x1x384xf32, #tpu.memory_space<vmem>>, vector<1x1x384xf32>
    %115 = vector.shape_cast %114 : vector<1x1x384xf32> to vector<1x384xf32>
    %116 = vector.broadcast %115 : vector<1x384xf32> to vector<16x384xf32>
    %117 = arith.addf %113, %116 : vector<16x384xf32>
    %118 = arith.truncf %117 : vector<16x384xf32> to vector<16x384xbf16>
    %119 = vector.extract_strided_slice %118 {offsets = [0, 0], sizes = [16, 128], strides = [1, 1]} : vector<16x384xbf16> to vector<16x128xbf16>
    %120 = vector.extract_strided_slice %118 {offsets = [0, 128], sizes = [16, 128], strides = [1, 1]} : vector<16x384xbf16> to vector<16x128xbf16>
    %121 = vector.extract_strided_slice %118 {offsets = [0, 256], sizes = [16, 128], strides = [1, 1]} : vector<16x384xbf16> to vector<16x128xbf16>
    %122 = tpu.concatenate %120, %120, %120, %120 in 0 : vector<16x128xbf16>, vector<16x128xbf16>, vector<16x128xbf16>, vector<16x128xbf16> -> vector<64x128xbf16>
    %123 = arith.mulf %122, %0 : vector<64x128xbf16>
    %124 = tpu.concatenate %121, %121, %121, %121 in 0 : vector<16x128xbf16>, vector<16x128xbf16>, vector<16x128xbf16>, vector<16x128xbf16> -> vector<64x128xbf16>
    %125 = arith.mulf %124, %0 : vector<64x128xbf16>
    %cst_68 = arith.constant dense<0.000000e+00> : vector<16x64xf32>
    %126 = tpu.matmul %119, %123, %cst_68 {dimension_numbers = #tpu.dot_dimension_numbers<[1], [1], [0], [0], [0, 0, 1, 0], [], []>} : vector<16x128xbf16>, vector<64x128xbf16>, vector<16x64xf32> -> vector<16x64xf32>
    %cst_69 = arith.constant 0.353553385 : f32
    %127 = vector.broadcast %cst_69 : f32 to vector<16x64xf32>
    %128 = arith.mulf %126, %127 : vector<16x64xf32>
    %129 = arith.addf %128, %1 : vector<16x64xf32>
    %cst_70 = arith.constant dense<0xFF800000> : vector<16xf32>
    %130 = vector.multi_reduction <maximumf>, %129, %cst_70 [1] : vector<16x64xf32> to vector<16xf32>
    %131 = vector.shape_cast %130 : vector<16xf32> to vector<16x1xf32>
    %132 = vector.broadcast %131 : vector<16x1xf32> to vector<16x64xf32>
    %133 = arith.subf %129, %132 : vector<16x64xf32>
    %134 = math.exp %133 : vector<16x64xf32>
    %cst_71 = arith.constant dense<0.000000e+00> : vector<16x64xf32>
    %135 = tpu.matmul %134, %2, %cst_71 {dimension_numbers = #tpu.dot_dimension_numbers<[1], [0], [0], [1], [0, 0, 1, 1], [], []>} : vector<16x64xf32>, vector<64x64xf32>, vector<16x64xf32> -> vector<16x64xf32>
    %136 = tpu.reciprocal %135 : vector<16x64xf32> -> vector<16x64xf32>
    %137 = arith.mulf %134, %136 : vector<16x64xf32>
    %138 = arith.truncf %137 : vector<16x64xf32> to vector<16x64xbf16>
    %cst_72 = arith.constant dense<0.000000e+00> : vector<16x128xf32>
    %139 = tpu.matmul %138, %125, %cst_72 {dimension_numbers = #tpu.dot_dimension_numbers<[1], [0], [0], [1], [0, 0, 1, 1], [], []>} : vector<16x64xbf16>, vector<64x128xbf16>, vector<16x128xf32> -> vector<16x128xf32>
    %140 = arith.truncf %139 : vector<16x128xf32> to vector<16x128xbf16>
    %c1_73 = arith.constant 1 : index
    %c0_74 = arith.constant 0 : index
    %c0_75 = arith.constant 0 : index
    %141 = vector.load %arg6[%c1_73, %c0_74, %c0_75] : memref<2x128x32xbf16, #tpu.memory_space<vmem>>, vector<1x128x32xbf16>
    %142 = vector.shape_cast %141 : vector<1x128x32xbf16> to vector<128x32xbf16>
    %cst_76 = arith.constant dense<0.000000e+00> : vector<16x32xf32>
    %143 = tpu.matmul %140, %142, %cst_76 {dimension_numbers = #tpu.dot_dimension_numbers<[1], [0], [0], [1], [0, 0, 1, 1], [], []>} : vector<16x128xbf16>, vector<128x32xbf16>, vector<16x32xf32> -> vector<16x32xf32>
    %c1_77 = arith.constant 1 : index
    %c0_78 = arith.constant 0 : index
    %c0_79 = arith.constant 0 : index
    %144 = vector.load %arg7[%c1_77, %c0_78, %c0_79] : memref<2x1x32xf32, #tpu.memory_space<vmem>>, vector<1x1x32xf32>
    %145 = vector.shape_cast %144 : vector<1x1x32xf32> to vector<1x32xf32>
    %146 = vector.broadcast %145 : vector<1x32xf32> to vector<16x32xf32>
    %147 = arith.addf %143, %146 : vector<16x32xf32>
    %148 = arith.addf %109, %147 : vector<16x32xf32>
    %c1_80 = arith.constant 1 : index
    %c0_81 = arith.constant 0 : index
    %c0_82 = arith.constant 0 : index
    %149 = vector.load %arg8[%c1_80, %c0_81, %c0_82] : memref<2x1x32xf32, #tpu.memory_space<vmem>>, vector<1x1x32xf32>
    %150 = vector.shape_cast %149 : vector<1x1x32xf32> to vector<1x32xf32>
    %c1_83 = arith.constant 1 : index
    %c0_84 = arith.constant 0 : index
    %c0_85 = arith.constant 0 : index
    %151 = vector.load %arg9[%c1_83, %c0_84, %c0_85] : memref<2x1x32xf32, #tpu.memory_space<vmem>>, vector<1x1x32xf32>
    %152 = vector.shape_cast %151 : vector<1x1x32xf32> to vector<1x32xf32>
    %cst_86 = arith.constant dense<0.000000e+00> : vector<16xf32>
    %153 = vector.multi_reduction <add>, %148, %cst_86 [1] : vector<16x32xf32> to vector<16xf32>
    %154 = vector.shape_cast %153 : vector<16xf32> to vector<16x1xf32>
    %cst_87 = arith.constant 3.200000e+01 : f32
    %155 = vector.broadcast %cst_87 : f32 to vector<16x1xf32>
    %156 = arith.divf %154, %155 : vector<16x1xf32>
    %157 = vector.broadcast %156 : vector<16x1xf32> to vector<16x32xf32>
    %158 = arith.subf %148, %157 : vector<16x32xf32>
    %159 = arith.mulf %158, %158 : vector<16x32xf32>
    %cst_88 = arith.constant dense<0.000000e+00> : vector<16xf32>
    %160 = vector.multi_reduction <add>, %159, %cst_88 [1] : vector<16x32xf32> to vector<16xf32>
    %161 = vector.shape_cast %160 : vector<16xf32> to vector<16x1xf32>
    %cst_89 = arith.constant 3.200000e+01 : f32
    %162 = vector.broadcast %cst_89 : f32 to vector<16x1xf32>
    %163 = arith.divf %161, %162 : vector<16x1xf32>
    %cst_90 = arith.constant 9.99999974E-6 : f32
    %164 = vector.broadcast %cst_90 : f32 to vector<16x1xf32>
    %165 = arith.addf %163, %164 : vector<16x1xf32>
    %166 = math.rsqrt %165 : vector<16x1xf32>
    %167 = vector.broadcast %166 : vector<16x1xf32> to vector<16x32xf32>
    %168 = arith.mulf %158, %167 : vector<16x32xf32>
    %169 = vector.broadcast %150 : vector<1x32xf32> to vector<16x32xf32>
    %170 = arith.mulf %168, %169 : vector<16x32xf32>
    %171 = vector.broadcast %152 : vector<1x32xf32> to vector<16x32xf32>
    %172 = arith.addf %170, %171 : vector<16x32xf32>
    %173 = arith.truncf %172 : vector<16x32xf32> to vector<16x32xbf16>
    %c1_91 = arith.constant 1 : index
    %c0_92 = arith.constant 0 : index
    %c0_93 = arith.constant 0 : index
    %174 = vector.load %arg10[%c1_91, %c0_92, %c0_93] : memref<2x32x64xbf16, #tpu.memory_space<vmem>>, vector<1x32x64xbf16>
    %175 = vector.shape_cast %174 : vector<1x32x64xbf16> to vector<32x64xbf16>
    %cst_94 = arith.constant dense<0.000000e+00> : vector<16x64xf32>
    %176 = tpu.matmul %173, %175, %cst_94 {dimension_numbers = #tpu.dot_dimension_numbers<[1], [0], [0], [1], [0, 0, 1, 1], [], []>} : vector<16x32xbf16>, vector<32x64xbf16>, vector<16x64xf32> -> vector<16x64xf32>
    %c1_95 = arith.constant 1 : index
    %c0_96 = arith.constant 0 : index
    %c0_97 = arith.constant 0 : index
    %177 = vector.load %arg11[%c1_95, %c0_96, %c0_97] : memref<2x1x64xf32, #tpu.memory_space<vmem>>, vector<1x1x64xf32>
    %178 = vector.shape_cast %177 : vector<1x1x64xf32> to vector<1x64xf32>
    %179 = vector.broadcast %178 : vector<1x64xf32> to vector<16x64xf32>
    %180 = arith.addf %176, %179 : vector<16x64xf32>
    %cst_98 = arith.constant 0.000000e+00 : f32
    %181 = vector.broadcast %cst_98 : f32 to vector<16x64xf32>
    %182 = arith.maximumf %180, %181 : vector<16x64xf32>
    %183 = arith.truncf %182 : vector<16x64xf32> to vector<16x64xbf16>
    %c1_99 = arith.constant 1 : index
    %c0_100 = arith.constant 0 : index
    %c0_101 = arith.constant 0 : index
    %184 = vector.load %arg12[%c1_99, %c0_100, %c0_101] : memref<2x64x32xbf16, #tpu.memory_space<vmem>>, vector<1x64x32xbf16>
    %185 = vector.shape_cast %184 : vector<1x64x32xbf16> to vector<64x32xbf16>
    %cst_102 = arith.constant dense<0.000000e+00> : vector<16x32xf32>
    %186 = tpu.matmul %183, %185, %cst_102 {dimension_numbers = #tpu.dot_dimension_numbers<[1], [0], [0], [1], [0, 0, 1, 1], [], []>} : vector<16x64xbf16>, vector<64x32xbf16>, vector<16x32xf32> -> vector<16x32xf32>
    %c1_103 = arith.constant 1 : index
    %c0_104 = arith.constant 0 : index
    %c0_105 = arith.constant 0 : index
    %187 = vector.load %arg13[%c1_103, %c0_104, %c0_105] : memref<2x1x32xf32, #tpu.memory_space<vmem>>, vector<1x1x32xf32>
    %188 = vector.shape_cast %187 : vector<1x1x32xf32> to vector<1x32xf32>
    %189 = vector.broadcast %188 : vector<1x32xf32> to vector<16x32xf32>
    %190 = arith.addf %186, %189 : vector<16x32xf32>
    %191 = arith.addf %172, %190 : vector<16x32xf32>
    %c1_106 = arith.constant 1 : index
    %c0_107 = arith.constant 0 : index
    %c0_108 = arith.constant 0 : index
    %192 = vector.load %arg14[%c1_106, %c0_107, %c0_108] : memref<2x1x32xf32, #tpu.memory_space<vmem>>, vector<1x1x32xf32>
    %193 = vector.shape_cast %192 : vector<1x1x32xf32> to vector<1x32xf32>
    %c1_109 = arith.constant 1 : index
    %c0_110 = arith.constant 0 : index
    %c0_111 = arith.constant 0 : index
    %194 = vector.load %arg15[%c1_109, %c0_110, %c0_111] : memref<2x1x32xf32, #tpu.memory_space<vmem>>, vector<1x1x32xf32>
    %195 = vector.shape_cast %194 : vector<1x1x32xf32> to vector<1x32xf32>
    %cst_112 = arith.constant dense<0.000000e+00> : vector<16xf32>
    %196 = vector.multi_reduction <add>, %191, %cst_112 [1] : vector<16x32xf32> to vector<16xf32>
    %197 = vector.shape_cast %196 : vector<16xf32> to vector<16x1xf32>
    %cst_113 = arith.constant 3.200000e+01 : f32
    %198 = vector.broadcast %cst_113 : f32 to vector<16x1xf32>
    %199 = arith.divf %197, %198 : vector<16x1xf32>
    %200 = vector.broadcast %199 : vector<16x1xf32> to vector<16x32xf32>
    %201 = arith.subf %191, %200 : vector<16x32xf32>
    %202 = arith.mulf %201, %201 : vector<16x32xf32>
    %cst_114 = arith.constant dense<0.000000e+00> : vector<16xf32>
    %203 = vector.multi_reduction <add>, %202, %cst_114 [1] : vector<16x32xf32> to vector<16xf32>
    %204 = vector.shape_cast %203 : vector<16xf32> to vector<16x1xf32>
    %cst_115 = arith.constant 3.200000e+01 : f32
    %205 = vector.broadcast %cst_115 : f32 to vector<16x1xf32>
    %206 = arith.divf %204, %205 : vector<16x1xf32>
    %cst_116 = arith.constant 9.99999974E-6 : f32
    %207 = vector.broadcast %cst_116 : f32 to vector<16x1xf32>
    %208 = arith.addf %206, %207 : vector<16x1xf32>
    %209 = math.rsqrt %208 : vector<16x1xf32>
    %210 = vector.broadcast %209 : vector<16x1xf32> to vector<16x32xf32>
    %211 = arith.mulf %201, %210 : vector<16x32xf32>
    %212 = vector.broadcast %193 : vector<1x32xf32> to vector<16x32xf32>
    %213 = arith.mulf %211, %212 : vector<16x32xf32>
    %214 = vector.broadcast %195 : vector<1x32xf32> to vector<16x32xf32>
    %215 = arith.addf %213, %214 : vector<16x32xf32>
    %216 = arith.truncf %215 : vector<16x32xf32> to vector<16x32xbf16>
    %c0_117 = arith.constant 0 : index
    %c0_118 = arith.constant 0 : index
    %217 = vector.load %arg16[%c0_117, %c0_118] : memref<32x128xbf16, #tpu.memory_space<vmem>>, vector<32x128xbf16>
    %cst_119 = arith.constant dense<0.000000e+00> : vector<16x128xf32>
    %218 = tpu.matmul %216, %217, %cst_119 {dimension_numbers = #tpu.dot_dimension_numbers<[1], [0], [0], [1], [0, 0, 1, 1], [], []>} : vector<16x32xbf16>, vector<32x128xbf16>, vector<16x128xf32> -> vector<16x128xf32>
    %c0_120 = arith.constant 0 : index
    %c0_121 = arith.constant 0 : index
    %219 = vector.load %arg17[%c0_120, %c0_121] : memref<1x128xf32, #tpu.memory_space<vmem>>, vector<1x128xf32>
    %220 = vector.broadcast %219 : vector<1x128xf32> to vector<16x128xf32>
    %221 = arith.addf %218, %220 : vector<16x128xf32>
    %c0_122 = arith.constant 0 : index
    %c0_123 = arith.constant 0 : index
    %222 = vector.load %arg18[%c0_122, %c0_123] : memref<16x128xf32, #tpu.memory_space<vmem>>, vector<16x128xf32>
    tpu.vector_store %arg18[%c0_122, %c0_123], %221 {strides = array<i32>} : memref<16x128xf32, #tpu.memory_space<vmem>>, vector<16x128xf32>,
    return
  }
}

</mosaic_0001>

<llo_original>
// kernel: my_transformer_forward.1
$region0: #{my_transformer_forward.1}
  #allocation0 [shape = 'u32[]', space=smem, size = 0x4, offset = 0x4, fixed_abs, tag = 'smem constant byte address 0x4 - core index']
  #allocation1 [shape = 'u32[144,128]{1,0:T(1,128)}', space=vmem, size = 0x12000, scoped, tag = 'internal scratch']
  %s0 = inlined_call_operand.hbm [shape: f32[16,32], index: 0, kind: input, shape index: {}]
  %s1 = inlined_call_operand.vmem [shape: bf16[64,128], index: 1, kind: input, shape index: {}]
  %s2 = inlined_call_operand.vmem [shape: f32[16,64], index: 2, kind: input, shape index: {}]
  %s3 = inlined_call_operand.vmem [shape: f32[64,64], index: 3, kind: input, shape index: {}]
  %s4 = inlined_call_operand.vmem [shape: bf16[2,32,384], index: 4, kind: input, shape index: {}]
  %s5 = inlined_call_operand.hbm [shape: f32[2,1,384], index: 5, kind: input, shape index: {}]
  %s6 = inlined_call_operand.vmem [shape: bf16[2,128,32], index: 6, kind: input, shape index: {}]
  %s7 = inlined_call_operand.vmem [shape: f32[2,1,32], index: 7, kind: input, shape index: {}]
  %s8 = inlined_call_operand.hbm [shape: f32[2,1,32], index: 8, kind: input, shape index: {}]
  %s9 = inlined_call_operand.hbm [shape: f32[2,1,32], index: 9, kind: input, shape index: {}]
  %s10 = inlined_call_operand.vmem [shape: bf16[2,32,64], index: 10, kind: input, shape index: {}]
  %s11 = inlined_call_operand.hbm [shape: f32[2,1,64], index: 11, kind: input, shape index: {}]
  %s12 = inlined_call_operand.vmem [shape: bf16[2,64,32], index: 12, kind: input, shape index: {}]
  %s13 = inlined_call_operand.hbm [shape: f32[2,1,32], index: 13, kind: input, shape index: {}]
  %s14 = inlined_call_operand.hbm [shape: f32[2,1,32], index: 14, kind: input, shape index: {}]
  %s15 = inlined_call_operand.hbm [shape: f32[2,1,32], index: 15, kind: input, shape index: {}]
  %s16 = inlined_call_operand.hbm [shape: bf16[32,128], index: 16, kind: input, shape index: {}]
  %s17 = inlined_call_operand.hbm [shape: f32[1,128], index: 17, kind: input, shape index: {}]
  %s18 = inlined_call_operand.hbm [shape: f32[16,128], index: 18, kind: output, shape index: {}]
  %s19 = sld [smem:[#allocation0]]
  $region122: #{my_transformer_forward.1} parent=0
    _
  %s21 = ssub.s32 1, %s19
  %s22 = scalar_select 0, %s21, %s19
  $region1: #{my_transformer_forward.1} parent=0
    #allocation2 [shape = 'u8[8192]{0}', space=vmem, size = 0x2000, scoped, tag = 'input window, operand 0, single buffered']
    #allocation3 [shape = 's32[1]{0}', space=sflag, size = 0x4, scoped, tag = 'scoped memory for my_transformer_forward.1']
    #allocation4 [shape = 's32[1]{0}', space=sflag, size = 0x4, scoped, tag = 'scoped memory for my_transformer_forward.1']
    #allocation5 [shape = 'u8[3072]{0}', space=vmem, size = 0xc00, scoped, tag = 'input window, operand 5, single buffered']
    #allocation6 [shape = 's32[1]{0}', space=sflag, size = 0x4, scoped, tag = 'scoped memory for my_transformer_forward.1']
    #allocation7 [shape = 'u8[1024]{0}', space=vmem, size = 0x400, scoped, tag = 'input window, operand 8, single buffered']
    #allocation8 [shape = 'u8[1024]{0}', space=vmem, size = 0x400, scoped, tag = 'input window, operand 9, single buffered']
    #allocation9 [shape = 's32[1]{0}', space=sflag, size = 0x4, scoped, tag = 'scoped memory for my_transformer_forward.1']
    #allocation10 [shape = 'u8[1024]{0}', space=vmem, size = 0x400, scoped, tag = 'input window, operand 11, single buffered']
    #allocation11 [shape = 'u8[1024]{0}', space=vmem, size = 0x400, scoped, tag = 'input window, operand 13, single buffered']
    #allocation12 [shape = 's32[1]{0}', space=sflag, size = 0x4, scoped, tag = 'scoped memory for my_transformer_forward.1']
    #allocation13 [shape = 'u8[1024]{0}', space=vmem, size = 0x400, scoped, tag = 'input window, operand 14, single buffered']
    #allocation14 [shape = 'u8[1024]{0}', space=vmem, size = 0x400, scoped, tag = 'input window, operand 15, single buffered']
    #allocation15 [shape = 's32[1]{0}', space=sflag, size = 0x4, scoped, tag = 'scoped memory for my_transformer_forward.1']
    #allocation16 [shape = 'u8[8192]{0}', space=vmem, size = 0x2000, scoped, tag = 'input window, operand 16, single buffered']
    #allocation17 [shape = 'u8[512]{0}', space=vmem, size = 0x400, scoped, tag = 'input window, operand 17, single buffered']
    #allocation18 [shape = 's32[1]{0}', space=sflag, size = 0x4, scoped, tag = 'scoped memory for my_transformer_forward.1']
    #allocation19 [shape = 'u8[8192]{0}', space=vmem, size = 0x2000, scoped, tag = 'output window, operand 0, single buffered']
    %23 = vsyncpa [#allocation3], 0
    %24 = vsyncpa [#allocation6], 0
    %25 = vsyncpa [#allocation9], 0
    %26 = vsyncpa [#allocation12], 0
    %27 = vsyncpa [#allocation15], 0
    %28 = vsyncpa [#allocation18], 0
    %29 = vsyncpa [#allocation4], 0
    // Predicated region
    $region2: #{my_transformer_forward.1} parent=1 // pred_check
      _
    $region3: #{my_transformer_forward.1} parent=1 // pred_check_branch
      %31 = sbr.rel (0) target = $region5
    $region4: #{my_transformer_forward.1} parent=1 // pred_region
      %s33 = ssub.s32 256, 256
      %34 = vsyncadd [#allocation3], %s33
      %s35 = sshll.u32 [#allocation2], 4
      %s36 = int_to_ptr.vmem [resolvable:$true] %s35
      %41 = dma.hbm_to_vmem [thread:$0]  %s0, 256, %s36, [#allocation3], 128, 128, 8
    $region5: #{my_transformer_forward.1} parent=1 // pred_fallthru
      _
    // Predicated region
    $region6: #{my_transformer_forward.1} parent=1 // pred_check
      _
    $region7: #{my_transformer_forward.1} parent=1 // pred_check_branch
      %43 = sbr.rel (0) target = $region9
    $region8: #{my_transformer_forward.1} parent=1 // pred_region
      _
    $region9: #{my_transformer_forward.1} parent=1 // pred_fallthru
      _
    // Predicated region
    $region10: #{my_transformer_forward.1} parent=1 // pred_check
      _
    $region11: #{my_transformer_forward.1} parent=1 // pred_check_branch
      %45 = sbr.rel (0) target = $region13
    $region12: #{my_transformer_forward.1} parent=1 // pred_region
      _
    $region13: #{my_transformer_forward.1} parent=1 // pred_fallthru
      _
    // Predicated region
    $region14: #{my_transformer_forward.1} parent=1 // pred_check
      _
    $region15: #{my_transformer_forward.1} parent=1 // pred_check_branch
      %47 = sbr.rel (0) target = $region17
    $region16: #{my_transformer_forward.1} parent=1 // pred_region
      _
    $region17: #{my_transformer_forward.1} parent=1 // pred_fallthru
      _
    // Predicated region
    $region18: #{my_transformer_forward.1} parent=1 // pred_check
      _
    $region19: #{my_transformer_forward.1} parent=1 // pred_check_branch
      %49 = sbr.rel (0) target = $region21
    $region20: #{my_transformer_forward.1} parent=1 // pred_region
      _
    $region21: #{my_transformer_forward.1} parent=1 // pred_fallthru
      _
    // Predicated region
    $region22: #{my_transformer_forward.1} parent=1 // pred_check
      _
    $region23: #{my_transformer_forward.1} parent=1 // pred_check_branch
      %51 = sbr.rel (0) target = $region25
    $region24: #{my_transformer_forward.1} parent=1 // pred_region
      %s53 = ssub.s32 96, 96
      %54 = vsyncadd [#allocation6], %s53
      %s55 = sshll.u32 [#allocation5], 4
      %s56 = int_to_ptr.vmem [resolvable:$true] %s55
      %61 = dma.hbm_to_vmem [thread:$0]  %s5, 96, %s56, [#allocation6], 48, 48, 3
    $region25: #{my_transformer_forward.1} parent=1 // pred_fallthru
      _
    // Predicated region
    $region26: #{my_transformer_forward.1} parent=1 // pred_check
      _
    $region27: #{my_transformer_forward.1} parent=1 // pred_check_branch
      %63 = sbr.rel (0) target = $region29
    $region28: #{my_transformer_forward.1} parent=1 // pred_region
      _
    $region29: #{my_transformer_forward.1} parent=1 // pred_fallthru
      _
    // Predicated region
    $region30: #{my_transformer_forward.1} parent=1 // pred_check
      _
    $region31: #{my_transformer_forward.1} parent=1 // pred_check_branch
      %65 = sbr.rel (0) target = $region33
    $region32: #{my_transformer_forward.1} parent=1 // pred_region
      _
    $region33: #{my_transformer_forward.1} parent=1 // pred_fallthru
      _
    // Predicated region
    $region34: #{my_transformer_forward.1} parent=1 // pred_check
      _
    $region35: #{my_transformer_forward.1} parent=1 // pred_check_branch
      %67 = sbr.rel (0) target = $region37
    $region36: #{my_transformer_forward.1} parent=1 // pred_region
      %s69 = ssub.s32 32, 32
      %70 = vsyncadd [#allocation6], %s69
      %s71 = sshll.u32 [#allocation7], 4
      %s72 = int_to_ptr.vmem [resolvable:$true] %s71
      %77 = dma.hbm_to_vmem [thread:$0]  %s8, 32, %s72, [#allocation6], 16, 16, 1
    $region37: #{my_transformer_forward.1} parent=1 // pred_fallthru
      _
    // Predicated region
    $region38: #{my_transformer_forward.1} parent=1 // pred_check
      _
    $region39: #{my_transformer_forward.1} parent=1 // pred_check_branch
      %79 = sbr.rel (0) target = $region41
    $region40: #{my_transformer_forward.1} parent=1 // pred_region
      %s81 = ssub.s32 32, 32
      %82 = vsyncadd [#allocation9], %s81
      %s83 = sshll.u32 [#allocation8], 4
      %s84 = int_to_ptr.vmem [resolvable:$true] %s83
      %89 = dma.hbm_to_vmem [thread:$0]  %s9, 32, %s84, [#allocation9], 16, 16, 1
    $region41: #{my_transformer_forward.1} parent=1 // pred_fallthru
      _
    // Predicated region
    $region42: #{my_transformer_forward.1} parent=1 // pred_check
      _
    $region43: #{my_transformer_forward.1} parent=1 // pred_check_branch
      %91 = sbr.rel (0) target = $region45
    $region44: #{my_transformer_forward.1} parent=1 // pred_region
      _
    $region45: #{my_transformer_forward.1} parent=1 // pred_fallthru
      _
    // Predicated region
    $region46: #{my_transformer_forward.1} parent=1 // pred_check
      _
    $region47: #{my_transformer_forward.1} parent=1 // pred_check_branch
      %93 = sbr.rel (0) target = $region49
    $region48: #{my_transformer_forward.1} parent=1 // pred_region
      %s95 = ssub.s32 32, 32
      %96 = vsyncadd [#allocation9], %s95
      %s97 = sshll.u32 [#allocation10], 4
      %s98 = int_to_ptr.vmem [resolvable:$true] %s97
      %103 = dma.hbm_to_vmem [thread:$0]  %s11, 32, %s98, [#allocation9], 16, 16, 1
    $region49: #{my_transformer_forward.1} parent=1 // pred_fallthru
      _
    // Predicated region
    $region50: #{my_transformer_forward.1} parent=1 // pred_check
      _
    $region51: #{my_transformer_forward.1} parent=1 // pred_check_branch
      %105 = sbr.rel (0) target = $region53
    $region52: #{my_transformer_forward.1} parent=1 // pred_region
      _
    $region53: #{my_transformer_forward.1} parent=1 // pred_fallthru
      _
    // Predicated region
    $region54: #{my_transformer_forward.1} parent=1 // pred_check
      _
    $region55: #{my_transformer_forward.1} parent=1 // pred_check_branch
      %107 = sbr.rel (0) target = $region57
    $region56: #{my_transformer_forward.1} parent=1 // pred_region
      %s109 = ssub.s32 32, 32
      %110 = vsyncadd [#allocation12], %s109
      %s111 = sshll.u32 [#allocation11], 4
      %s112 = int_to_ptr.vmem [resolvable:$true] %s111
      %117 = dma.hbm_to_vmem [thread:$0]  %s13, 32, %s112, [#allocation12], 16, 16, 1
    $region57: #{my_transformer_forward.1} parent=1 // pred_fallthru
      _
    // Predicated region
    $region58: #{my_transformer_forward.1} parent=1 // pred_check
      _
    $region59: #{my_transformer_forward.1} parent=1 // pred_check_branch
      %119 = sbr.rel (0) target = $region61
    $region60: #{my_transformer_forward.1} parent=1 // pred_region
      %s121 = ssub.s32 32, 32
      %122 = vsyncadd [#allocation12], %s121
      %s123 = sshll.u32 [#allocation13], 4
      %s124 = int_to_ptr.vmem [resolvable:$true] %s123
      %129 = dma.hbm_to_vmem [thread:$0]  %s14, 32, %s124, [#allocation12], 16, 16, 1
    $region61: #{my_transformer_forward.1} parent=1 // pred_fallthru
      _
    // Predicated region
    $region62: #{my_transformer_forward.1} parent=1 // pred_check
      _
    $region63: #{my_transformer_forward.1} parent=1 // pred_check_branch
      %131 = sbr.rel (0) target = $region65
    $region64: #{my_transformer_forward.1} parent=1 // pred_region
      %s133 = ssub.s32 32, 32
      %134 = vsyncadd [#allocation15], %s133
      %s135 = sshll.u32 [#allocation14], 4
      %s136 = int_to_ptr.vmem [resolvable:$true] %s135
      %141 = dma.hbm_to_vmem [thread:$0]  %s15, 32, %s136, [#allocation15], 16, 16, 1
    $region65: #{my_transformer_forward.1} parent=1 // pred_fallthru
      _
    // Predicated region
    $region66: #{my_transformer_forward.1} parent=1 // pred_check
      _
    $region67: #{my_transformer_forward.1} parent=1 // pred_check_branch
      %143 = sbr.rel (0) target = $region69
    $region68: #{my_transformer_forward.1} parent=1 // pred_region
      %s145 = ssub.s32 256, 256
      %146 = vsyncadd [#allocation15], %s145
      %s147 = sshll.u32 [#allocation16], 4
      %s148 = int_to_ptr.vmem [resolvable:$true] %s147
      %153 = dma.hbm_to_vmem [thread:$0]  %s16, 256, %s148, [#allocation15], 64, 64, 4
    $region69: #{my_transformer_forward.1} parent=1 // pred_fallthru
      _
    // Predicated region
    $region70: #{my_transformer_forward.1} parent=1 // pred_check
      _
    $region71: #{my_transformer_forward.1} parent=1 // pred_check_branch
      %155 = sbr.rel (0) target = $region73
    $region72: #{my_transformer_forward.1} parent=1 // pred_region
      %s157 = ssub.s32 16, 16
      %158 = vsyncadd [#allocation18], %s157
      %s160 = sshll.u32 [#allocation17], 4
      %s161 = int_to_ptr.vmem [resolvable:$true] %s160
      %163 = dma.hbm_to_vmem [thread:$0]  %s17, 16, %s161, [#allocation18]
    $region73: #{my_transformer_forward.1} parent=1 // pred_fallthru
      _
    // Predicated region
    $region74: #{my_transformer_forward.1} parent=1 // pred_check
      _
    $region75: #{my_transformer_forward.1} parent=1 // pred_check_branch
      %165 = sbr.rel (0) target = $region77
    $region76: #{my_transformer_forward.1} parent=1 // pred_region
      %166 = dma.done [#allocation3], 256
    $region77: #{my_transformer_forward.1} parent=1 // pred_fallthru
      _
    // Predicated region
    $region78: #{my_transformer_forward.1} parent=1 // pred_check
      _
    $region79: #{my_transformer_forward.1} parent=1 // pred_check_branch
      %168 = sbr.rel (0) target = $region81
    $region80: #{my_transformer_forward.1} parent=1 // pred_region
      %169 = dma.done [#allocation6], 96
    $region81: #{my_transformer_forward.1} parent=1 // pred_fallthru
      _
    // Predicated region
    $region82: #{my_transformer_forward.1} parent=1 // pred_check
      _
    $region83: #{my_transformer_forward.1} parent=1 // pred_check_branch
      %171 = sbr.rel (0) target = $region85
    $region84: #{my_transformer_forward.1} parent=1 // pred_region
      %172 = dma.done [#allocation6], 32
    $region85: #{my_transformer_forward.1} parent=1 // pred_fallthru
      _
    // Predicated region
    $region86: #{my_transformer_forward.1} parent=1 // pred_check
      _
    $region87: #{my_transformer_forward.1} parent=1 // pred_check_branch
      %174 = sbr.rel (0) target = $region89
    $region88: #{my_transformer_forward.1} parent=1 // pred_region
      %175 = dma.done [#allocation9], 32
    $region89: #{my_transformer_forward.1} parent=1 // pred_fallthru
      _
    // Predicated region
    $region90: #{my_transformer_forward.1} parent=1 // pred_check
      _
    $region91: #{my_transformer_forward.1} parent=1 // pred_check_branch
      %177 = sbr.rel (0) target = $region93
    $region92: #{my_transformer_forward.1} parent=1 // pred_region
      %178 = dma.done [#allocation9], 32
    $region93: #{my_transformer_forward.1} parent=1 // pred_fallthru
      _
    // Predicated region
    $region94: #{my_transformer_forward.1} parent=1 // pred_check
      _
    $region95: #{my_transformer_forward.1} parent=1 // pred_check_branch
      %180 = sbr.rel (0) target = $region97
    $region96: #{my_transformer_forward.1} parent=1 // pred_region
      %181 = dma.done [#allocation12], 32
    $region97: #{my_transformer_forward.1} parent=1 // pred_fallthru
      _
    // Predicated region
    $region98: #{my_transformer_forward.1} parent=1 // pred_check
      _
    $region99: #{my_transformer_forward.1} parent=1 // pred_check_branch
      %183 = sbr.rel (0) target = $region101
    $region100: #{my_transformer_forward.1} parent=1 // pred_region
      %184 = dma.done [#allocation12], 32
    $region101: #{my_transformer_forward.1} parent=1 // pred_fallthru
      _
    // Predicated region
    $region102: #{my_transformer_forward.1} parent=1 // pred_check
      _
    $region103: #{my_transformer_forward.1} parent=1 // pred_check_branch
      %186 = sbr.rel (0) target = $region105
    $region104: #{my_transformer_forward.1} parent=1 // pred_region
      %187 = dma.done [#allocation15], 32
    $region105: #{my_transformer_forward.1} parent=1 // pred_fallthru
      _
    // Predicated region
    $region106: #{my_transformer_forward.1} parent=1 // pred_check
      _
    $region107: #{my_transformer_forward.1} parent=1 // pred_check_branch
      %189 = sbr.rel (0) target = $region109
    $region108: #{my_transformer_forward.1} parent=1 // pred_region
      %190 = dma.done [#allocation15], 256
    $region109: #{my_transformer_forward.1} parent=1 // pred_fallthru
      _
    // Predicated region
    $region110: #{my_transformer_forward.1} parent=1 // pred_check
      _
    $region111: #{my_transformer_forward.1} parent=1 // pred_check_branch
      %192 = sbr.rel (0) target = $region113
    $region112: #{my_transformer_forward.1} parent=1 // pred_region
      %193 = dma.done [#allocation18], 16
    $region113: #{my_transformer_forward.1} parent=1 // pred_fallthru
      _
    %v195 = vld [vmem:[%s1] sm:$0xf]
    %v196 = vld [vmem:[%s1 + $0x4] sm:$0xf]
    %v197 = vld [vmem:[%s1 + $0x8] sm:$0xf]
    %v198 = vld [vmem:[%s1 + $0xc] sm:$0xf]
    %v199 = vld [vmem:[%s1 + $0x10] sm:$0xf]
    %v200 = vld [vmem:[%s1 + $0x14] sm:$0xf]
    %v201 = vld [vmem:[%s1 + $0x18] sm:$0xf]
    %v202 = vld [vmem:[%s1 + $0x1c] sm:$0xf]
    %v203 = vld [vmem:[%s2] sm:$0xff]
    %v204 = vld [vmem:[%s2 + $0x8] sm:$0xff]
    %v205 = vld [vmem:[%s3] sm:$0xff]
    %v206 = vld [vmem:[%s3 + $0x8] sm:$0xff]
    %v207 = vld [vmem:[%s3 + $0x10] sm:$0xff]
    %v208 = vld [vmem:[%s3 + $0x18] sm:$0xff]
    %v209 = vld [vmem:[%s3 + $0x20] sm:$0xff]
    %v210 = vld [vmem:[%s3 + $0x28] sm:$0xff]
    %v211 = vld [vmem:[%s3 + $0x30] sm:$0xff]
    %v212 = vld [vmem:[%s3 + $0x38] sm:$0xff]
    %v213 = vld [vmem:[#allocation2] sm:$0xff]
    %v214 = vld [vmem:[#allocation2 + $0x8] sm:$0xff]
    %v215 = vpack.c.bf16 %v214, %v213
    %v216 = vld [vmem:[%s4] sm:$0xff]
    %v217 = vld [vmem:[%s4 + $0x8] sm:$0xf]
    %v218 = vld [vmem:[%s4 + $0xc] sm:$0xff]
    %v219 = vld [vmem:[%s4 + $0x14] sm:$0xf]
    %v220 = vld [vmem:[%s4 + $0x18] sm:$0xff]
    %v221 = vld [vmem:[%s4 + $0x20] sm:$0xf]
    %v222 = vld [vmem:[%s4 + $0x24] sm:$0xff]
    %v223 = vld [vmem:[%s4 + $0x2c] sm:$0xf]
    %v224 = vld [vmem:[#allocation5] sm:$0x7]
    %v226 = vlaneseq
    %v227 = vshrl.u32 %v226, 7
    %v228 = vsub.s32 0, %v227
    %v229 = vrot.slane %v224, %v228
    %v230 = vlaneseq
    %v231 = vshrl.u32 %v230, 7
    %v232 = vsub.s32 1, %v231
    %v233 = vrot.slane %v224, %v232
    %v234 = vlaneseq
    %v235 = vshrl.u32 %v234, 7
    %v236 = vsub.s32 2, %v235
    %v237 = vrot.slane %v224, %v236
    %v249 = vunpack.c.l.b16 %v216
    %v250 = vunpack.c.h.b16 %v216
    %v251 = vunpack.c.l.b16 %v217
    %v252 = vunpack.c.l.b16 %v218
    %v253 = vunpack.c.h.b16 %v218
    %v254 = vunpack.c.l.b16 %v219
    %v255 = vunpack.c.l.b16 %v220
    %v256 = vunpack.c.h.b16 %v220
    %v257 = vunpack.c.l.b16 %v221
    %v258 = vunpack.c.l.b16 %v222
    %v259 = vunpack.c.h.b16 %v222
    %v260 = vunpack.c.l.b16 %v223
    %v261 = vpack.c.b16 %v252, %v249
    %v262 = vpack.c.b16 %v253, %v250
    %v263 = vpack.c.b16 %v254, %v251
    %v264 = vpack.c.b16 %v258, %v255
    %v265 = vpack.c.b16 %v259, %v256
    %v266 = vpack.c.b16 %v260, %v257
    %vm273 = vcmask 261120
    %v275 = vsel %vm273, %v215, 0
    %277 = vmatprep.subr.bf16.mxu0 0
    %278 = vmatpush1.bf16.msra.mxu0 0
    %279 = vmatprep.subr.bf16.mxu0 0
    %280 = vmatpush1.bf16.msra.mxu0 0
    %281 = vmatprep.subr.bf16.mxu0 0
    %282 = vmatpush1.bf16.msra.mxu0 0
    %283 = vmatprep.subr.bf16.mxu0 0
    %284 = vmatpush1.bf16.msra.mxu0 0
    %285 = vmatprep.subr.bf16.mxu0 0
    %286 = vmatpush1.bf16.msra.mxu0 0
    %287 = vmatprep.subr.bf16.mxu0 0
    %288 = vmatpush1.bf16.msra.mxu0 0
    %289 = vmatprep.subr.bf16.mxu0 %v265
    %290 = vmatpush1.bf16.msra.mxu0 %v264
    %291 = vmatprep.subr.bf16.mxu0 %v262
    %292 = vmatpush1.bf16.msra.mxu0 %v261
    %293 = vmatprep.subr.bf16.mxu0 0
    %294 = vmatpush2.bf16.msra.mxu0 0
    %295 = vmatprep.subr.bf16.mxu0 0
    %296 = vmatpush2.bf16.msra.mxu0 0
    %297 = vmatprep.subr.bf16.mxu0 0
    %298 = vmatpush2.bf16.msra.mxu0 0
    %299 = vmatprep.subr.bf16.mxu0 0
    %300 = vmatpush2.bf16.msra.mxu0 0
    %301 = vmatprep.subr.bf16.mxu0 0
    %302 = vmatpush2.bf16.msra.mxu0 0
    %303 = vmatprep.subr.bf16.mxu0 0
    %304 = vmatpush2.bf16.msra.mxu0 0
    %305 = vmatprep.subr.bf16.mxu0 0
    %306 = vmatpush2.bf16.msra.mxu0 0
    %307 = vmatprep.subr.bf16.mxu0 0
    %308 = vmatpush2.bf16.msra.mxu0 0
    %309 = vmatprep.mubr.bf16.mxu0 0
    %310 = vmatmul.mubr.bf16.gmra.mxu0 %v275
    %v311 = vpop.f32.mrf.mxu0
    %v312 = vadd.f32 %v229, %v311
    %v313 = vpop.f32.mrf.mxu0
    %v314 = vadd.f32 %v233, %v313
    %v315 = vpop.f32.mrf.mxu0
    %v316 = vadd.f32 %v229, %v315
    %v317 = vpop.f32.mrf.mxu0
    %v318 = vadd.f32 %v233, %v317
    %319 = vdwg.mxu0
    %320 = vmatprep.subr.bf16.mxu0 0
    %321 = vmatpush1.bf16.msra.mxu0 0
    %322 = vmatprep.subr.bf16.mxu0 0
    %323 = vmatpush1.bf16.msra.mxu0 0
    %324 = vmatprep.subr.bf16.mxu0 0
    %325 = vmatpush1.bf16.msra.mxu0 0
    %326 = vmatprep.subr.bf16.mxu0 0
    %327 = vmatpush1.bf16.msra.mxu0 0
    %328 = vmatprep.subr.bf16.mxu0 0
    %329 = vmatpush1.bf16.msra.mxu0 0
    %330 = vmatprep.subr.bf16.mxu0 0
    %331 = vmatpush1.bf16.msra.mxu0 0
    %332 = vmatprep.subr.bf16.mxu0 0
    %333 = vmatpush1.bf16.msra.mxu0 %v266
    %334 = vmatprep.subr.bf16.mxu0 0
    %335 = vmatpush1.bf16.msra.mxu0 %v263
    %336 = vmatprep.subr.bf16.mxu0 0
    %337 = vmatpush2.bf16.msra.mxu0 0
    %338 = vmatprep.subr.bf16.mxu0 0
    %339 = vmatpush2.bf16.msra.mxu0 0
    %340 = vmatprep.subr.bf16.mxu0 0
    %341 = vmatpush2.bf16.msra.mxu0 0
    %342 = vmatprep.subr.bf16.mxu0 0
    %343 = vmatpush2.bf16.msra.mxu0 0
    %344 = vmatprep.subr.bf16.mxu0 0
    %345 = vmatpush2.bf16.msra.mxu0 0
    %346 = vmatprep.subr.bf16.mxu0 0
    %347 = vmatpush2.bf16.msra.mxu0 0
    %348 = vmatprep.subr.bf16.mxu0 0
    %349 = vmatpush2.bf16.msra.mxu0 0
    %350 = vmatprep.subr.bf16.mxu0 0
    %351 = vmatpush2.bf16.msra.mxu0 0
    %352 = vmatprep.mubr.bf16.mxu0 0
    %353 = vmatmul.mubr.bf16.gmra.mxu0 %v275
    %v354 = vpop.f32.mrf.mxu0
    %v355 = vadd.f32 %v237, %v354
    %v356 = vpop.f32.mrf.mxu0
    %v357 = vpop.f32.mrf.mxu0
    %v358 = vadd.f32 %v237, %v357
    %v359 = vpop.f32.mrf.mxu0
    %360 = vdwg.mxu0
    %v361 = vpack.c.bf16 %v316, %v312
    %v362 = vpack.c.bf16 %v318, %v314
    %v363 = vpack.c.bf16 %v358, %v355
    %v372 = vunpack.c.l.b16 %v195
    %v373 = vunpack.c.l.b16 %v196
    %v374 = vunpack.c.l.b16 %v197
    %v375 = vunpack.c.l.b16 %v198
    %v376 = vunpack.c.l.b16 %v199
    %v377 = vunpack.c.l.b16 %v200
    %v378 = vunpack.c.l.b16 %v201
    %v379 = vunpack.c.l.b16 %v202
    %v380 = vpack.c.b16 %v373, %v372
    %v381 = vpack.c.b16 %v375, %v374
    %v382 = vpack.c.b16 %v377, %v376
    %v383 = vpack.c.b16 %v379, %v378
    %v388 = vmul.bf16 %v362, %v380
    %v389 = vmul.bf16 %v362, %v381
    %v390 = vmul.bf16 %v362, %v382
    %v391 = vmul.bf16 %v362, %v383
    %v392 = vmul.bf16 %v363, %v380
    %v393 = vmul.bf16 %v363, %v381
    %v394 = vmul.bf16 %v363, %v382
    %v395 = vmul.bf16 %v363, %v383
    %396 = vmatprep.subr.bf16.mxu0 0
    %397 = vmatpush1.bf16.xpose.msra.mxu0 0
    %398 = vmatprep.subr.bf16.mxu0 0
    %399 = vmatpush1.bf16.xpose.msra.mxu0 0
    %400 = vmatprep.subr.bf16.mxu0 0
    %401 = vmatpush1.bf16.xpose.msra.mxu0 0
    %402 = vmatprep.subr.bf16.mxu0 0
    %403 = vmatpush1.bf16.xpose.msra.mxu0 0
    %404 = vmatprep.subr.bf16.mxu0 0
    %405 = vmatpush1.bf16.xpose.msra.mxu0 %v391
    %406 = vmatprep.subr.bf16.mxu0 0
    %407 = vmatpush1.bf16.xpose.msra.mxu0 %v390
    %408 = vmatprep.subr.bf16.mxu0 0
    %409 = vmatpush1.bf16.xpose.msra.mxu0 %v389
    %410 = vmatprep.subr.bf16.mxu0 0
    %411 = vmatpush1.bf16.xpose.msra.mxu0 %v388
    %412 = vmatprep.subr.bf16.mxu0 0
    %413 = vmatpush2.bf16.xpose.msra.mxu0 0
    %414 = vmatprep.subr.bf16.mxu0 0
    %415 = vmatpush2.bf16.xpose.msra.mxu0 0
    %416 = vmatprep.subr.bf16.mxu0 0
    %417 = vmatpush2.bf16.xpose.msra.mxu0 0
    %418 = vmatprep.subr.bf16.mxu0 0
    %419 = vmatpush2.bf16.xpose.msra.mxu0 0
    %420 = vmatprep.subr.bf16.mxu0 0
    %421 = vmatpush2.bf16.xpose.msra.mxu0 0
    %422 = vmatprep.subr.bf16.mxu0 0
    %423 = vmatpush2.bf16.xpose.msra.mxu0 0
    %424 = vmatprep.subr.bf16.mxu0 0
    %425 = vmatpush2.bf16.xpose.msra.mxu0 0
    %426 = vmatprep.subr.bf16.mxu0 0
    %427 = vmatpush2.bf16.xpose.msra.mxu0 0
    %428 = vmatprep.mubr.bf16.mxu0 0
    %429 = vmatmul.mubr.bf16.gmra.mxu0 %v361
    %v430 = vpop.f32.mrf.mxu0
    %v431 = vadd.f32 0.0, %v430
    %v432 = vpop.f32.mrf.mxu0
    %v433 = vpop.f32.mrf.mxu0
    %v434 = vadd.f32 0.0, %v433
    %v435 = vpop.f32.mrf.mxu0
    %436 = vdwg.mxu0
    %v437 = vmul.f32 %v431, 0.35355338
    %v438 = vmul.f32 %v434, 0.35355338
    %v439 = vadd.f32 %v437, %v203
    %v440 = vadd.f32 %v438, %v204
    %vm441 = vcmask 523264
    %v442 = vsel %vm441, %v439, -inf
    %443 = vmax.xlane.f32.xlu0 %v442
    %v444 = vpop.xlane.xlu0 %443
    %v445 = vsel %vm441, %v440, -inf
    %446 = vmax.xlane.f32.xlu0 %v445
    %v447 = vpop.xlane.xlu0 %446
    %v448 = vsub.f32 %v439, %v444
    %v449 = vsub.f32 %v440, %v447
    %v450 = vmul.f32 %v448, 1.442695
    %v451 = vpow.pop %v450
    %v452 = vmul.f32 %v449, 1.442695
    %v453 = vpow.pop %v452
    %v455 = vsel %vm441, %v451, 0
    %v458 = vsel %vm441, %v453, 0
    %460 = vmatprep.subr.mxu0 0.0
    %461 = vmatpush1.msra.mxu0 0.0
    %462 = vmatprep.subr.mxu0 0.0
    %463 = vmatpush1.msra.mxu0 0.0
    %464 = vmatprep.subr.mxu0 0.0
    %465 = vmatpush1.msra.mxu0 0.0
    %466 = vmatprep.subr.mxu0 0.0
    %467 = vmatpush1.msra.mxu0 0.0
    %468 = vmatprep.subr.mxu0 0.0
    %469 = vmatpush1.msra.mxu0 0.0
    %470 = vmatprep.subr.mxu0 0.0
    %471 = vmatpush1.msra.mxu0 0.0
    %472 = vmatprep.subr.mxu0 0.0
    %473 = vmatpush1.msra.mxu0 0.0
    %474 = vmatprep.subr.mxu0 0.0
    %475 = vmatpush1.msra.mxu0 0.0
    %476 = vmatprep.subr.mxu0 0.0
    %477 = vmatpush1.msra.mxu0 %v212
    %478 = vmatprep.subr.mxu0 0.0
    %479 = vmatpush1.msra.mxu0 %v211
    %480 = vmatprep.subr.mxu0 0.0
    %481 = vmatpush1.msra.mxu0 %v210
    %482 = vmatprep.subr.mxu0 0.0
    %483 = vmatpush1.msra.mxu0 %v209
    %484 = vmatprep.subr.mxu0 0.0
    %485 = vmatpush1.msra.mxu0 %v208
    %486 = vmatprep.subr.mxu0 0.0
    %487 = vmatpush1.msra.mxu0 %v207
    %488 = vmatprep.subr.mxu0 0.0
    %489 = vmatpush1.msra.mxu0 %v206
    %490 = vmatprep.subr.mxu0 0.0
    %491 = vmatpush1.msra.mxu0 %v205
    %492 = vmatprep.subr.mxu0 0.0
    %493 = vmatpush2.msra.mxu0 0.0
    %494 = vmatprep.subr.mxu0 0.0
    %495 = vmatpush2.msra.mxu0 0.0
    %496 = vmatprep.subr.mxu0 0.0
    %497 = vmatpush2.msra.mxu0 0.0
    %498 = vmatprep.subr.mxu0 0.0
    %499 = vmatpush2.msra.mxu0 0.0
    %500 = vmatprep.subr.mxu0 0.0
    %501 = vmatpush2.msra.mxu0 0.0
    %502 = vmatprep.subr.mxu0 0.0
    %503 = vmatpush2.msra.mxu0 0.0
    %504 = vmatprep.subr.mxu0 0.0
    %505 = vmatpush2.msra.mxu0 0.0
    %506 = vmatprep.subr.mxu0 0.0
    %507 = vmatpush2.msra.mxu0 0.0
    %508 = vmatprep.subr.mxu0 0.0
    %509 = vmatpush2.msra.mxu0 0.0
    %510 = vmatprep.subr.mxu0 0.0
    %511 = vmatpush2.msra.mxu0 0.0
    %512 = vmatprep.subr.mxu0 0.0
    %513 = vmatpush2.msra.mxu0 0.0
    %514 = vmatprep.subr.mxu0 0.0
    %515 = vmatpush2.msra.mxu0 0.0
    %516 = vmatprep.subr.mxu0 0.0
    %517 = vmatpush2.msra.mxu0 0.0
    %518 = vmatprep.subr.mxu0 0.0
    %519 = vmatpush2.msra.mxu0 0.0
    %520 = vmatprep.subr.mxu0 0.0
    %521 = vmatpush2.msra.mxu0 0.0
    %522 = vmatprep.subr.mxu0 0.0
    %523 = vmatpush2.msra.mxu0 0.0
    %524 = vmatprep.mubr.f32.mxu0 0.0
    %525 = vmatmul.mubr.f32.gmra.mxu0 %v455
    %v526 = vpop.f32.mrf.mxu0
    %v527 = vadd.f32 0.0, %v526
    %v528 = vpop.f32.mrf.mxu0
    %529 = vmatprep.mubr.f32.mxu0 0.0
    %530 = vmatmul.mubr.f32.gmra.mxu0 %v458
    %v531 = vpop.f32.mrf.mxu0
    %v532 = vadd.f32 0.0, %v531
    %v533 = vpop.f32.mrf.mxu0
    %534 = vdwg.mxu0
    %v535 = vrcp.pop %v527
    %v536 = vrcp.pop %v532
    %v537 = vmul.f32 %v451, %v535
    %v538 = vmul.f32 %v453, %v536
    %v539 = vpack.c.bf16 %v538, %v537
    %v541 = vsel %vm441, %v539, 0
    %543 = vmatprep.subr.bf16.mxu0 0
    %544 = vmatpush1.bf16.msra.mxu0 0
    %545 = vmatprep.subr.bf16.mxu0 0
    %546 = vmatpush1.bf16.msra.mxu0 0
    %547 = vmatprep.subr.bf16.mxu0 0
    %548 = vmatpush1.bf16.msra.mxu0 0
    %549 = vmatprep.subr.bf16.mxu0 0
    %550 = vmatpush1.bf16.msra.mxu0 0
    %551 = vmatprep.subr.bf16.mxu0 0
    %552 = vmatpush1.bf16.msra.mxu0 %v395
    %553 = vmatprep.subr.bf16.mxu0 0
    %554 = vmatpush1.bf16.msra.mxu0 %v394
    %555 = vmatprep.subr.bf16.mxu0 0
    %556 = vmatpush1.bf16.msra.mxu0 %v393
    %557 = vmatprep.subr.bf16.mxu0 0
    %558 = vmatpush1.bf16.msra.mxu0 %v392
    %559 = vmatprep.subr.bf16.mxu0 0
    %560 = vmatpush2.bf16.msra.mxu0 0
    %561 = vmatprep.subr.bf16.mxu0 0
    %562 = vmatpush2.bf16.msra.mxu0 0
    %563 = vmatprep.subr.bf16.mxu0 0
    %564 = vmatpush2.bf16.msra.mxu0 0
    %565 = vmatprep.subr.bf16.mxu0 0
    %566 = vmatpush2.bf16.msra.mxu0 0
    %567 = vmatprep.subr.bf16.mxu0 0
    %568 = vmatpush2.bf16.msra.mxu0 0
    %569 = vmatprep.subr.bf16.mxu0 0
    %570 = vmatpush2.bf16.msra.mxu0 0
    %571 = vmatprep.subr.bf16.mxu0 0
    %572 = vmatpush2.bf16.msra.mxu0 0
    %573 = vmatprep.subr.bf16.mxu0 0
    %574 = vmatpush2.bf16.msra.mxu0 0
    %575 = vmatprep.mubr.bf16.mxu0 0
    %576 = vmatmul.mubr.bf16.gmra.mxu0 %v541
    %v577 = vpop.f32.mrf.mxu0
    %v578 = vadd.f32 0.0, %v577
    %v579 = vpop.f32.mrf.mxu0
    %v580 = vpop.f32.mrf.mxu0
    %v581 = vadd.f32 0.0, %v580
    %v582 = vpop.f32.mrf.mxu0
    %583 = vdwg.mxu0
    %v584 = vpack.c.bf16 %v581, %v578
    %v585 = vld [vmem:[%s6] sm:$0xf]
    %v586 = vld [vmem:[%s6 + $0x4] sm:$0xf]
    %v587 = vld [vmem:[%s6 + $0x8] sm:$0xf]
    %v588 = vld [vmem:[%s6 + $0xc] sm:$0xf]
    %v589 = vld [vmem:[%s6 + $0x10] sm:$0xf]
    %v590 = vld [vmem:[%s6 + $0x14] sm:$0xf]
    %v591 = vld [vmem:[%s6 + $0x18] sm:$0xf]
    %v592 = vld [vmem:[%s6 + $0x1c] sm:$0xf]
    %v593 = vld [vmem:[%s6 + $0x20] sm:$0xf]
    %v594 = vld [vmem:[%s6 + $0x24] sm:$0xf]
    %v595 = vld [vmem:[%s6 + $0x28] sm:$0xf]
    %v596 = vld [vmem:[%s6 + $0x2c] sm:$0xf]
    %v597 = vld [vmem:[%s6 + $0x30] sm:$0xf]
    %v598 = vld [vmem:[%s6 + $0x34] sm:$0xf]
    %v599 = vld [vmem:[%s6 + $0x38] sm:$0xf]
    %v600 = vld [vmem:[%s6 + $0x3c] sm:$0xf]
    %v601 = vld [vmem:[%s7] sm:$0x1]
    %v603 = vlaneseq
    %v604 = vshrl.u32 %v603, 7
    %v605 = vsub.s32 0, %v604
    %v606 = vrot.slane %v601, %v605
    %v624 = vunpack.c.l.b16 %v585
    %v625 = vunpack.c.l.b16 %v586
    %v626 = vunpack.c.l.b16 %v587
    %v627 = vunpack.c.l.b16 %v588
    %v628 = vunpack.c.l.b16 %v589
    %v629 = vunpack.c.l.b16 %v590
    %v630 = vunpack.c.l.b16 %v591
    %v631 = vunpack.c.l.b16 %v592
    %v632 = vunpack.c.l.b16 %v593
    %v633 = vunpack.c.l.b16 %v594
    %v634 = vunpack.c.l.b16 %v595
    %v635 = vunpack.c.l.b16 %v596
    %v636 = vunpack.c.l.b16 %v597
    %v637 = vunpack.c.l.b16 %v598
    %v638 = vunpack.c.l.b16 %v599
    %v639 = vunpack.c.l.b16 %v600
    %v640 = vpack.c.b16 %v625, %v624
    %v641 = vpack.c.b16 %v627, %v626
    %v642 = vpack.c.b16 %v629, %v628
    %v643 = vpack.c.b16 %v631, %v630
    %v644 = vpack.c.b16 %v633, %v632
    %v645 = vpack.c.b16 %v635, %v634
    %v646 = vpack.c.b16 %v637, %v636
    %v647 = vpack.c.b16 %v639, %v638
    %656 = vmatprep.subr.bf16.mxu0 0
    %657 = vmatpush1.bf16.msra.mxu0 %v647
    %658 = vmatprep.subr.bf16.mxu0 0
    %659 = vmatpush1.bf16.msra.mxu0 %v646
    %660 = vmatprep.subr.bf16.mxu0 0
    %661 = vmatpush1.bf16.msra.mxu0 %v645
    %662 = vmatprep.subr.bf16.mxu0 0
    %663 = vmatpush1.bf16.msra.mxu0 %v644
    %664 = vmatprep.subr.bf16.mxu0 0
    %665 = vmatpush1.bf16.msra.mxu0 %v643
    %666 = vmatprep.subr.bf16.mxu0 0
    %667 = vmatpush1.bf16.msra.mxu0 %v642
    %668 = vmatprep.subr.bf16.mxu0 0
    %669 = vmatpush1.bf16.msra.mxu0 %v641
    %670 = vmatprep.subr.bf16.mxu0 0
    %671 = vmatpush1.bf16.msra.mxu0 %v640
    %672 = vmatprep.subr.bf16.mxu0 0
    %673 = vmatpush2.bf16.msra.mxu0 0
    %674 = vmatprep.subr.bf16.mxu0 0
    %675 = vmatpush2.bf16.msra.mxu0 0
    %676 = vmatprep.subr.bf16.mxu0 0
    %677 = vmatpush2.bf16.msra.mxu0 0
    %678 = vmatprep.subr.bf16.mxu0 0
    %679 = vmatpush2.bf16.msra.mxu0 0
    %680 = vmatprep.subr.bf16.mxu0 0
    %681 = vmatpush2.bf16.msra.mxu0 0
    %682 = vmatprep.subr.bf16.mxu0 0
    %683 = vmatpush2.bf16.msra.mxu0 0
    %684 = vmatprep.subr.bf16.mxu0 0
    %685 = vmatpush2.bf16.msra.mxu0 0
    %686 = vmatprep.subr.bf16.mxu0 0
    %687 = vmatpush2.bf16.msra.mxu0 0
    %688 = vmatprep.mubr.bf16.mxu0 0
    %689 = vmatmul.mubr.bf16.gmra.mxu0 %v584
    %v690 = vpop.f32.mrf.mxu0
    %v691 = vadd.f32 %v606, %v690
    %v692 = vpop.f32.mrf.mxu0
    %v693 = vpop.f32.mrf.mxu0
    %v694 = vadd.f32 %v606, %v693
    %v695 = vpop.f32.mrf.mxu0
    %696 = vdwg.mxu0
    %v697 = vadd.f32 %v213, %v691
    %v698 = vadd.f32 %v214, %v694
    %v699 = vld [vmem:[#allocation7] sm:$0x1]
    %v700 = vld [vmem:[#allocation8] sm:$0x1]
    %v701 = vsel %vm273, %v697, 0.0
    %702 = vadd.xlane.f32.xlu0 %v701
    %v703 = vpop.xlane.xlu0 %702
    %v704 = vsel %vm273, %v698, 0.0
    %705 = vadd.xlane.f32.xlu0 %v704
    %v706 = vpop.xlane.xlu0 %705
    %v707 = vrcp.pop 32.0
    %v708 = vmul.f32 %v703, %v707
    %v709 = vmul.f32 %v706, %v707
    %v710 = vsub.f32 %v697, %v708
    %v711 = vsub.f32 %v698, %v709
    %v712 = vmul.f32 %v710, %v710
    %v713 = vmul.f32 %v711, %v711
    %v714 = vsel %vm273, %v712, 0.0
    %715 = vadd.xlane.f32.xlu0 %v714
    %v716 = vpop.xlane.xlu0 %715
    %v717 = vsel %vm273, %v713, 0.0
    %718 = vadd.xlane.f32.xlu0 %v717
    %v719 = vpop.xlane.xlu0 %718
    %v720 = vmul.f32 %v716, %v707
    %v721 = vmul.f32 %v719, %v707
    %v722 = vadd.f32 %v720, 1e-05
    %v723 = vadd.f32 %v721, 1e-05
    %v724 = vrsqrt.pop %v722
    %v725 = vrsqrt.pop %v723
    %v726 = vmul.f32 %v710, %v724
    %v727 = vmul.f32 %v711, %v725
    %v729 = vlaneseq
    %v730 = vshrl.u32 %v729, 7
    %v731 = vsub.s32 0, %v730
    %v732 = vrot.slane %v699, %v731
    %v734 = vmul.f32 %v726, %v732
    %v735 = vmul.f32 %v727, %v732
    %v737 = vlaneseq
    %v738 = vshrl.u32 %v737, 7
    %v739 = vsub.s32 0, %v738
    %v740 = vrot.slane %v700, %v739
    %v742 = vadd.f32 %v734, %v740
    %v743 = vadd.f32 %v735, %v740
    %v744 = vpack.c.bf16 %v743, %v742
    %v745 = vld [vmem:[%s10] sm:$0xf]
    %v746 = vld [vmem:[%s10 + $0x4] sm:$0xf]
    %v747 = vld [vmem:[%s10 + $0x8] sm:$0xf]
    %v748 = vld [vmem:[%s10 + $0xc] sm:$0xf]
    %v749 = vld [vmem:[#allocation10] sm:$0x1]
    %v751 = vlaneseq
    %v752 = vshrl.u32 %v751, 7
    %v753 = vsub.s32 0, %v752
    %v754 = vrot.slane %v749, %v753
    %v760 = vunpack.c.l.b16 %v745
    %v761 = vunpack.c.l.b16 %v746
    %v762 = vunpack.c.l.b16 %v747
    %v763 = vunpack.c.l.b16 %v748
    %v764 = vpack.c.b16 %v761, %v760
    %v765 = vpack.c.b16 %v763, %v762
    %v769 = vsel %vm273, %v744, 0
    %771 = vmatprep.subr.bf16.mxu0 0
    %772 = vmatpush1.bf16.msra.mxu0 0
    %773 = vmatprep.subr.bf16.mxu0 0
    %774 = vmatpush1.bf16.msra.mxu0 0
    %775 = vmatprep.subr.bf16.mxu0 0
    %776 = vmatpush1.bf16.msra.mxu0 0
    %777 = vmatprep.subr.bf16.mxu0 0
    %778 = vmatpush1.bf16.msra.mxu0 0
    %779 = vmatprep.subr.bf16.mxu0 0
    %780 = vmatpush1.bf16.msra.mxu0 0
    %781 = vmatprep.subr.bf16.mxu0 0
    %782 = vmatpush1.bf16.msra.mxu0 0
    %783 = vmatprep.subr.bf16.mxu0 0
    %784 = vmatpush1.bf16.msra.mxu0 %v765
    %785 = vmatprep.subr.bf16.mxu0 0
    %786 = vmatpush1.bf16.msra.mxu0 %v764
    %787 = vmatprep.subr.bf16.mxu0 0
    %788 = vmatpush2.bf16.msra.mxu0 0
    %789 = vmatprep.subr.bf16.mxu0 0
    %790 = vmatpush2.bf16.msra.mxu0 0
    %791 = vmatprep.subr.bf16.mxu0 0
    %792 = vmatpush2.bf16.msra.mxu0 0
    %793 = vmatprep.subr.bf16.mxu0 0
    %794 = vmatpush2.bf16.msra.mxu0 0
    %795 = vmatprep.subr.bf16.mxu0 0
    %796 = vmatpush2.bf16.msra.mxu0 0
    %797 = vmatprep.subr.bf16.mxu0 0
    %798 = vmatpush2.bf16.msra.mxu0 0
    %799 = vmatprep.subr.bf16.mxu0 0
    %800 = vmatpush2.bf16.msra.mxu0 0
    %801 = vmatprep.subr.bf16.mxu0 0
    %802 = vmatpush2.bf16.msra.mxu0 0
    %803 = vmatprep.mubr.bf16.mxu0 0
    %804 = vmatmul.mubr.bf16.gmra.mxu0 %v769
    %v805 = vpop.f32.mrf.mxu0
    %v806 = vadd.f32 %v754, %v805
    %v807 = vpop.f32.mrf.mxu0
    %v808 = vpop.f32.mrf.mxu0
    %v809 = vadd.f32 %v754, %v808
    %v810 = vpop.f32.mrf.mxu0
    %811 = vdwg.mxu0
    %v812 = vmax.f32 %v806, 0.0
    %v813 = vmax.f32 %v809, 0.0
    %v814 = vpack.c.bf16 %v813, %v812
    %v815 = vld [vmem:[%s12] sm:$0xf]
    %v816 = vld [vmem:[%s12 + $0x4] sm:$0xf]
    %v817 = vld [vmem:[%s12 + $0x8] sm:$0xf]
    %v818 = vld [vmem:[%s12 + $0xc] sm:$0xf]
    %v819 = vld [vmem:[%s12 + $0x10] sm:$0xf]
    %v820 = vld [vmem:[%s12 + $0x14] sm:$0xf]
    %v821 = vld [vmem:[%s12 + $0x18] sm:$0xf]
    %v822 = vld [vmem:[%s12 + $0x1c] sm:$0xf]
    %v823 = vld [vmem:[#allocation11] sm:$0x1]
    %v825 = vlaneseq
    %v826 = vshrl.u32 %v825, 7
    %v827 = vsub.s32 0, %v826
    %v828 = vrot.slane %v823, %v827
    %v838 = vunpack.c.l.b16 %v815
    %v839 = vunpack.c.l.b16 %v816
    %v840 = vunpack.c.l.b16 %v817
    %v841 = vunpack.c.l.b16 %v818
    %v842 = vunpack.c.l.b16 %v819
    %v843 = vunpack.c.l.b16 %v820
    %v844 = vunpack.c.l.b16 %v821
    %v845 = vunpack.c.l.b16 %v822
    %v846 = vpack.c.b16 %v839, %v838
    %v847 = vpack.c.b16 %v841, %v840
    %v848 = vpack.c.b16 %v843, %v842
    %v849 = vpack.c.b16 %v845, %v844
    %v855 = vsel %vm441, %v814, 0
    %857 = vmatprep.subr.bf16.mxu0 0
    %858 = vmatpush1.bf16.msra.mxu0 0
    %859 = vmatprep.subr.bf16.mxu0 0
    %860 = vmatpush1.bf16.msra.mxu0 0
    %861 = vmatprep.subr.bf16.mxu0 0
    %862 = vmatpush1.bf16.msra.mxu0 0
    %863 = vmatprep.subr.bf16.mxu0 0
    %864 = vmatpush1.bf16.msra.mxu0 0
    %865 = vmatprep.subr.bf16.mxu0 0
    %866 = vmatpush1.bf16.msra.mxu0 %v849
    %867 = vmatprep.subr.bf16.mxu0 0
    %868 = vmatpush1.bf16.msra.mxu0 %v848
    %869 = vmatprep.subr.bf16.mxu0 0
    %870 = vmatpush1.bf16.msra.mxu0 %v847
    %871 = vmatprep.subr.bf16.mxu0 0
    %872 = vmatpush1.bf16.msra.mxu0 %v846
    %873 = vmatprep.subr.bf16.mxu0 0
    %874 = vmatpush2.bf16.msra.mxu0 0
    %875 = vmatprep.subr.bf16.mxu0 0
    %876 = vmatpush2.bf16.msra.mxu0 0
    %877 = vmatprep.subr.bf16.mxu0 0
    %878 = vmatpush2.bf16.msra.mxu0 0
    %879 = vmatprep.subr.bf16.mxu0 0
    %880 = vmatpush2.bf16.msra.mxu0 0
    %881 = vmatprep.subr.bf16.mxu0 0
    %882 = vmatpush2.bf16.msra.mxu0 0
    %883 = vmatprep.subr.bf16.mxu0 0
    %884 = vmatpush2.bf16.msra.mxu0 0
    %885 = vmatprep.subr.bf16.mxu0 0
    %886 = vmatpush2.bf16.msra.mxu0 0
    %887 = vmatprep.subr.bf16.mxu0 0
    %888 = vmatpush2.bf16.msra.mxu0 0
    %889 = vmatprep.mubr.bf16.mxu0 0
    %890 = vmatmul.mubr.bf16.gmra.mxu0 %v855
    %v891 = vpop.f32.mrf.mxu0
    %v892 = vadd.f32 %v828, %v891
    %v893 = vpop.f32.mrf.mxu0
    %v894 = vpop.f32.mrf.mxu0
    %v895 = vadd.f32 %v828, %v894
    %v896 = vpop.f32.mrf.mxu0
    %897 = vdwg.mxu0
    %v898 = vadd.f32 %v742, %v892
    %v899 = vadd.f32 %v743, %v895
    %v900 = vld [vmem:[#allocation13] sm:$0x1]
    %v901 = vld [vmem:[#allocation14] sm:$0x1]
    %v902 = vsel %vm273, %v898, 0.0
    %903 = vadd.xlane.f32.xlu0 %v902
    %v904 = vpop.xlane.xlu0 %903
    %v905 = vsel %vm273, %v899, 0.0
    %906 = vadd.xlane.f32.xlu0 %v905
    %v907 = vpop.xlane.xlu0 %906
    %v908 = vmul.f32 %v904, %v707
    %v909 = vmul.f32 %v907, %v707
    %v910 = vsub.f32 %v898, %v908
    %v911 = vsub.f32 %v899, %v909
    %v912 = vmul.f32 %v910, %v910
    %v913 = vmul.f32 %v911, %v911
    %v914 = vsel %vm273, %v912, 0.0
    %915 = vadd.xlane.f32.xlu0 %v914
    %v916 = vpop.xlane.xlu0 %915
    %v917 = vsel %vm273, %v913, 0.0
    %918 = vadd.xlane.f32.xlu0 %v917
    %v919 = vpop.xlane.xlu0 %918
    %v920 = vmul.f32 %v916, %v707
    %v921 = vmul.f32 %v919, %v707
    %v922 = vadd.f32 %v920, 1e-05
    %v923 = vadd.f32 %v921, 1e-05
    %v924 = vrsqrt.pop %v922
    %v925 = vrsqrt.pop %v923
    %v926 = vmul.f32 %v910, %v924
    %v927 = vmul.f32 %v911, %v925
    %v929 = vlaneseq
    %v930 = vshrl.u32 %v929, 7
    %v931 = vsub.s32 0, %v930
    %v932 = vrot.slane %v900, %v931
    %v934 = vmul.f32 %v926, %v932
    %v935 = vmul.f32 %v927, %v932
    %v937 = vlaneseq
    %v938 = vshrl.u32 %v937, 7
    %v939 = vsub.s32 0, %v938
    %v940 = vrot.slane %v901, %v939
    %v942 = vadd.f32 %v934, %v940
    %v943 = vadd.f32 %v935, %v940
    %v944 = vpack.c.bf16 %v943, %v942
    %s945 = scalar_lea.vmem %s4, 48
    %v946 = vld [vmem:[%s945] sm:$0xff]
    %v947 = vld [vmem:[%s945 + $0x8] sm:$0xf]
    %v948 = vld [vmem:[%s945 + $0xc] sm:$0xff]
    %v949 = vld [vmem:[%s945 + $0x14] sm:$0xf]
    %v950 = vld [vmem:[%s945 + $0x18] sm:$0xff]
    %v951 = vld [vmem:[%s945 + $0x20] sm:$0xf]
    %v952 = vld [vmem:[%s945 + $0x24] sm:$0xff]
    %v953 = vld [vmem:[%s945 + $0x2c] sm:$0xf]
    %s954 = scalar_lea.vmem [#allocation5], 3
    %v955 = vld [vmem:[%s954] sm:$0x7]
    %v957 = vlaneseq
    %v958 = vshrl.u32 %v957, 7
    %v959 = vsub.s32 0, %v958
    %v960 = vrot.slane %v955, %v959
    %v961 = vlaneseq
    %v962 = vshrl.u32 %v961, 7
    %v963 = vsub.s32 1, %v962
    %v964 = vrot.slane %v955, %v963
    %v965 = vlaneseq
    %v966 = vshrl.u32 %v965, 7
    %v967 = vsub.s32 2, %v966
    %v968 = vrot.slane %v955, %v967
    %v980 = vunpack.c.l.b16 %v946
    %v981 = vunpack.c.h.b16 %v946
    %v982 = vunpack.c.l.b16 %v947
    %v983 = vunpack.c.l.b16 %v948
    %v984 = vunpack.c.h.b16 %v948
    %v985 = vunpack.c.l.b16 %v949
    %v986 = vunpack.c.l.b16 %v950
    %v987 = vunpack.c.h.b16 %v950
    %v988 = vunpack.c.l.b16 %v951
    %v989 = vunpack.c.l.b16 %v952
    %v990 = vunpack.c.h.b16 %v952
    %v991 = vunpack.c.l.b16 %v953
    %v992 = vpack.c.b16 %v983, %v980
    %v993 = vpack.c.b16 %v984, %v981
    %v994 = vpack.c.b16 %v985, %v982
    %v995 = vpack.c.b16 %v989, %v986
    %v996 = vpack.c.b16 %v990, %v987
    %v997 = vpack.c.b16 %v991, %v988
    %v1005 = vsel %vm273, %v944, 0
    %1007 = vmatprep.subr.bf16.mxu0 0
    %1008 = vmatpush1.bf16.msra.mxu0 0
    %1009 = vmatprep.subr.bf16.mxu0 0
    %1010 = vmatpush1.bf16.msra.mxu0 0
    %1011 = vmatprep.subr.bf16.mxu0 0
    %1012 = vmatpush1.bf16.msra.mxu0 0
    %1013 = vmatprep.subr.bf16.mxu0 0
    %1014 = vmatpush1.bf16.msra.mxu0 0
    %1015 = vmatprep.subr.bf16.mxu0 0
    %1016 = vmatpush1.bf16.msra.mxu0 0
    %1017 = vmatprep.subr.bf16.mxu0 0
    %1018 = vmatpush1.bf16.msra.mxu0 0
    %1019 = vmatprep.subr.bf16.mxu0 %v996
    %1020 = vmatpush1.bf16.msra.mxu0 %v995
    %1021 = vmatprep.subr.bf16.mxu0 %v993
    %1022 = vmatpush1.bf16.msra.mxu0 %v992
    %1023 = vmatprep.subr.bf16.mxu0 0
    %1024 = vmatpush2.bf16.msra.mxu0 0
    %1025 = vmatprep.subr.bf16.mxu0 0
    %1026 = vmatpush2.bf16.msra.mxu0 0
    %1027 = vmatprep.subr.bf16.mxu0 0
    %1028 = vmatpush2.bf16.msra.mxu0 0
    %1029 = vmatprep.subr.bf16.mxu0 0
    %1030 = vmatpush2.bf16.msra.mxu0 0
    %1031 = vmatprep.subr.bf16.mxu0 0
    %1032 = vmatpush2.bf16.msra.mxu0 0
    %1033 = vmatprep.subr.bf16.mxu0 0
    %1034 = vmatpush2.bf16.msra.mxu0 0
    %1035 = vmatprep.subr.bf16.mxu0 0
    %1036 = vmatpush2.bf16.msra.mxu0 0
    %1037 = vmatprep.subr.bf16.mxu0 0
    %1038 = vmatpush2.bf16.msra.mxu0 0
    %1039 = vmatprep.mubr.bf16.mxu0 0
    %1040 = vmatmul.mubr.bf16.gmra.mxu0 %v1005
    %v1041 = vpop.f32.mrf.mxu0
    %v1042 = vadd.f32 %v960, %v1041
    %v1043 = vpop.f32.mrf.mxu0
    %v1044 = vadd.f32 %v964, %v1043
    %v1045 = vpop.f32.mrf.mxu0
    %v1046 = vadd.f32 %v960, %v1045
    %v1047 = vpop.f32.mrf.mxu0
    %v1048 = vadd.f32 %v964, %v1047
    %1049 = vdwg.mxu0
    %1050 = vmatprep.subr.bf16.mxu0 0
    %1051 = vmatpush1.bf16.msra.mxu0 0
    %1052 = vmatprep.subr.bf16.mxu0 0
    %1053 = vmatpush1.bf16.msra.mxu0 0
    %1054 = vmatprep.subr.bf16.mxu0 0
    %1055 = vmatpush1.bf16.msra.mxu0 0
    %1056 = vmatprep.subr.bf16.mxu0 0
    %1057 = vmatpush1.bf16.msra.mxu0 0
    %1058 = vmatprep.subr.bf16.mxu0 0
    %1059 = vmatpush1.bf16.msra.mxu0 0
    %1060 = vmatprep.subr.bf16.mxu0 0
    %1061 = vmatpush1.bf16.msra.mxu0 0
    %1062 = vmatprep.subr.bf16.mxu0 0
    %1063 = vmatpush1.bf16.msra.mxu0 %v997
    %1064 = vmatprep.subr.bf16.mxu0 0
    %1065 = vmatpush1.bf16.msra.mxu0 %v994
    %1066 = vmatprep.subr.bf16.mxu0 0
    %1067 = vmatpush2.bf16.msra.mxu0 0
    %1068 = vmatprep.subr.bf16.mxu0 0
    %1069 = vmatpush2.bf16.msra.mxu0 0
    %1070 = vmatprep.subr.bf16.mxu0 0
    %1071 = vmatpush2.bf16.msra.mxu0 0
    %1072 = vmatprep.subr.bf16.mxu0 0
    %1073 = vmatpush2.bf16.msra.mxu0 0
    %1074 = vmatprep.subr.bf16.mxu0 0
    %1075 = vmatpush2.bf16.msra.mxu0 0
    %1076 = vmatprep.subr.bf16.mxu0 0
    %1077 = vmatpush2.bf16.msra.mxu0 0
    %1078 = vmatprep.subr.bf16.mxu0 0
    %1079 = vmatpush2.bf16.msra.mxu0 0
    %1080 = vmatprep.subr.bf16.mxu0 0
    %1081 = vmatpush2.bf16.msra.mxu0 0
    %1082 = vmatprep.mubr.bf16.mxu0 0
    %1083 = vmatmul.mubr.bf16.gmra.mxu0 %v1005
    %v1084 = vpop.f32.mrf.mxu0
    %v1085 = vadd.f32 %v968, %v1084
    %v1086 = vpop.f32.mrf.mxu0
    %v1087 = vpop.f32.mrf.mxu0
    %v1088 = vadd.f32 %v968, %v1087
    %v1089 = vpop.f32.mrf.mxu0
    %1090 = vdwg.mxu0
    %v1091 = vpack.c.bf16 %v1046, %v1042
    %v1092 = vpack.c.bf16 %v1048, %v1044
    %v1093 = vpack.c.bf16 %v1088, %v1085
    %v1094 = vmul.bf16 %v1092, %v380
    %v1095 = vmul.bf16 %v1092, %v381
    %v1096 = vmul.bf16 %v1092, %v382
    %v1097 = vmul.bf16 %v1092, %v383
    %v1098 = vmul.bf16 %v1093, %v380
    %v1099 = vmul.bf16 %v1093, %v381
    %v1100 = vmul.bf16 %v1093, %v382
    %v1101 = vmul.bf16 %v1093, %v383
    %1102 = vmatprep.subr.bf16.mxu0 0
    %1103 = vmatpush1.bf16.xpose.msra.mxu0 0
    %1104 = vmatprep.subr.bf16.mxu0 0
    %1105 = vmatpush1.bf16.xpose.msra.mxu0 0
    %1106 = vmatprep.subr.bf16.mxu0 0
    %1107 = vmatpush1.bf16.xpose.msra.mxu0 0
    %1108 = vmatprep.subr.bf16.mxu0 0
    %1109 = vmatpush1.bf16.xpose.msra.mxu0 0
    %1110 = vmatprep.subr.bf16.mxu0 0
    %1111 = vmatpush1.bf16.xpose.msra.mxu0 %v1097
    %1112 = vmatprep.subr.bf16.mxu0 0
    %1113 = vmatpush1.bf16.xpose.msra.mxu0 %v1096
    %1114 = vmatprep.subr.bf16.mxu0 0
    %1115 = vmatpush1.bf16.xpose.msra.mxu0 %v1095
    %1116 = vmatprep.subr.bf16.mxu0 0
    %1117 = vmatpush1.bf16.xpose.msra.mxu0 %v1094
    %1118 = vmatprep.subr.bf16.mxu0 0
    %1119 = vmatpush2.bf16.xpose.msra.mxu0 0
    %1120 = vmatprep.subr.bf16.mxu0 0
    %1121 = vmatpush2.bf16.xpose.msra.mxu0 0
    %1122 = vmatprep.subr.bf16.mxu0 0
    %1123 = vmatpush2.bf16.xpose.msra.mxu0 0
    %1124 = vmatprep.subr.bf16.mxu0 0
    %1125 = vmatpush2.bf16.xpose.msra.mxu0 0
    %1126 = vmatprep.subr.bf16.mxu0 0
    %1127 = vmatpush2.bf16.xpose.msra.mxu0 0
    %1128 = vmatprep.subr.bf16.mxu0 0
    %1129 = vmatpush2.bf16.xpose.msra.mxu0 0
    %1130 = vmatprep.subr.bf16.mxu0 0
    %1131 = vmatpush2.bf16.xpose.msra.mxu0 0
    %1132 = vmatprep.subr.bf16.mxu0 0
    %1133 = vmatpush2.bf16.xpose.msra.mxu0 0
    %1134 = vmatprep.mubr.bf16.mxu0 0
    %1135 = vmatmul.mubr.bf16.gmra.mxu0 %v1091
    %v1136 = vpop.f32.mrf.mxu0
    %v1137 = vadd.f32 0.0, %v1136
    %v1138 = vpop.f32.mrf.mxu0
    %v1139 = vpop.f32.mrf.mxu0
    %v1140 = vadd.f32 0.0, %v1139
    %v1141 = vpop.f32.mrf.mxu0
    %1142 = vdwg.mxu0
    %v1143 = vmul.f32 %v1137, 0.35355338
    %v1144 = vmul.f32 %v1140, 0.35355338
    %v1145 = vadd.f32 %v1143, %v203
    %v1146 = vadd.f32 %v1144, %v204
    %v1147 = vsel %vm441, %v1145, -inf
    %1148 = vmax.xlane.f32.xlu0 %v1147
    %v1149 = vpop.xlane.xlu0 %1148
    %v1150 = vsel %vm441, %v1146, -inf
    %1151 = vmax.xlane.f32.xlu0 %v1150
    %v1152 = vpop.xlane.xlu0 %1151
    %v1153 = vsub.f32 %v1145, %v1149
    %v1154 = vsub.f32 %v1146, %v1152
    %v1155 = vmul.f32 %v1153, 1.442695
    %v1156 = vpow.pop %v1155
    %v1157 = vmul.f32 %v1154, 1.442695
    %v1158 = vpow.pop %v1157
    %v1160 = vsel %vm441, %v1156, 0
    %v1163 = vsel %vm441, %v1158, 0
    %1165 = vmatprep.subr.mxu0 0.0
    %1166 = vmatpush1.msra.mxu0 0.0
    %1167 = vmatprep.subr.mxu0 0.0
    %1168 = vmatpush1.msra.mxu0 0.0
    %1169 = vmatprep.subr.mxu0 0.0
    %1170 = vmatpush1.msra.mxu0 0.0
    %1171 = vmatprep.subr.mxu0 0.0
    %1172 = vmatpush1.msra.mxu0 0.0
    %1173 = vmatprep.subr.mxu0 0.0
    %1174 = vmatpush1.msra.mxu0 0.0
    %1175 = vmatprep.subr.mxu0 0.0
    %1176 = vmatpush1.msra.mxu0 0.0
    %1177 = vmatprep.subr.mxu0 0.0
    %1178 = vmatpush1.msra.mxu0 0.0
    %1179 = vmatprep.subr.mxu0 0.0
    %1180 = vmatpush1.msra.mxu0 0.0
    %1181 = vmatprep.subr.mxu0 0.0
    %1182 = vmatpush1.msra.mxu0 %v212
    %1183 = vmatprep.subr.mxu0 0.0
    %1184 = vmatpush1.msra.mxu0 %v211
    %1185 = vmatprep.subr.mxu0 0.0
    %1186 = vmatpush1.msra.mxu0 %v210
    %1187 = vmatprep.subr.mxu0 0.0
    %1188 = vmatpush1.msra.mxu0 %v209
    %1189 = vmatprep.subr.mxu0 0.0
    %1190 = vmatpush1.msra.mxu0 %v208
    %1191 = vmatprep.subr.mxu0 0.0
    %1192 = vmatpush1.msra.mxu0 %v207
    %1193 = vmatprep.subr.mxu0 0.0
    %1194 = vmatpush1.msra.mxu0 %v206
    %1195 = vmatprep.subr.mxu0 0.0
    %1196 = vmatpush1.msra.mxu0 %v205
    %1197 = vmatprep.subr.mxu0 0.0
    %1198 = vmatpush2.msra.mxu0 0.0
    %1199 = vmatprep.subr.mxu0 0.0
    %1200 = vmatpush2.msra.mxu0 0.0
    %1201 = vmatprep.subr.mxu0 0.0
    %1202 = vmatpush2.msra.mxu0 0.0
    %1203 = vmatprep.subr.mxu0 0.0
    %1204 = vmatpush2.msra.mxu0 0.0
    %1205 = vmatprep.subr.mxu0 0.0
    %1206 = vmatpush2.msra.mxu0 0.0
    %1207 = vmatprep.subr.mxu0 0.0
    %1208 = vmatpush2.msra.mxu0 0.0
    %1209 = vmatprep.subr.mxu0 0.0
    %1210 = vmatpush2.msra.mxu0 0.0
    %1211 = vmatprep.subr.mxu0 0.0
    %1212 = vmatpush2.msra.mxu0 0.0
    %1213 = vmatprep.subr.mxu0 0.0
    %1214 = vmatpush2.msra.mxu0 0.0
    %1215 = vmatprep.subr.mxu0 0.0
    %1216 = vmatpush2.msra.mxu0 0.0
    %1217 = vmatprep.subr.mxu0 0.0
    %1218 = vmatpush2.msra.mxu0 0.0
    %1219 = vmatprep.subr.mxu0 0.0
    %1220 = vmatpush2.msra.mxu0 0.0
    %1221 = vmatprep.subr.mxu0 0.0
    %1222 = vmatpush2.msra.mxu0 0.0
    %1223 = vmatprep.subr.mxu0 0.0
    %1224 = vmatpush2.msra.mxu0 0.0
    %1225 = vmatprep.subr.mxu0 0.0
    %1226 = vmatpush2.msra.mxu0 0.0
    %1227 = vmatprep.subr.mxu0 0.0
    %1228 = vmatpush2.msra.mxu0 0.0
    %1229 = vmatprep.mubr.f32.mxu0 0.0
    %1230 = vmatmul.mubr.f32.gmra.mxu0 %v1160
    %v1231 = vpop.f32.mrf.mxu0
    %v1232 = vadd.f32 0.0, %v1231
    %v1233 = vpop.f32.mrf.mxu0
    %1234 = vmatprep.mubr.f32.mxu0 0.0
    %1235 = vmatmul.mubr.f32.gmra.mxu0 %v1163
    %v1236 = vpop.f32.mrf.mxu0
    %v1237 = vadd.f32 0.0, %v1236
    %v1238 = vpop.f32.mrf.mxu0
    %1239 = vdwg.mxu0
    %v1240 = vrcp.pop %v1232
    %v1241 = vrcp.pop %v1237
    %v1242 = vmul.f32 %v1156, %v1240
    %v1243 = vmul.f32 %v1158, %v1241
    %v1244 = vpack.c.bf16 %v1243, %v1242
    %v1246 = vsel %vm441, %v1244, 0
    %1248 = vmatprep.subr.bf16.mxu0 0
    %1249 = vmatpush1.bf16.msra.mxu0 0
    %1250 = vmatprep.subr.bf16.mxu0 0
    %1251 = vmatpush1.bf16.msra.mxu0 0
    %1252 = vmatprep.subr.bf16.mxu0 0
    %1253 = vmatpush1.bf16.msra.mxu0 0
    %1254 = vmatprep.subr.bf16.mxu0 0
    %1255 = vmatpush1.bf16.msra.mxu0 0
    %1256 = vmatprep.subr.bf16.mxu0 0
    %1257 = vmatpush1.bf16.msra.mxu0 %v1101
    %1258 = vmatprep.subr.bf16.mxu0 0
    %1259 = vmatpush1.bf16.msra.mxu0 %v1100
    %1260 = vmatprep.subr.bf16.mxu0 0
    %1261 = vmatpush1.bf16.msra.mxu0 %v1099
    %1262 = vmatprep.subr.bf16.mxu0 0
    %1263 = vmatpush1.bf16.msra.mxu0 %v1098
    %1264 = vmatprep.subr.bf16.mxu0 0
    %1265 = vmatpush2.bf16.msra.mxu0 0
    %1266 = vmatprep.subr.bf16.mxu0 0
    %1267 = vmatpush2.bf16.msra.mxu0 0
    %1268 = vmatprep.subr.bf16.mxu0 0
    %1269 = vmatpush2.bf16.msra.mxu0 0
    %1270 = vmatprep.subr.bf16.mxu0 0
    %1271 = vmatpush2.bf16.msra.mxu0 0
    %1272 = vmatprep.subr.bf16.mxu0 0
    %1273 = vmatpush2.bf16.msra.mxu0 0
    %1274 = vmatprep.subr.bf16.mxu0 0
    %1275 = vmatpush2.bf16.msra.mxu0 0
    %1276 = vmatprep.subr.bf16.mxu0 0
    %1277 = vmatpush2.bf16.msra.mxu0 0
    %1278 = vmatprep.subr.bf16.mxu0 0
    %1279 = vmatpush2.bf16.msra.mxu0 0
    %1280 = vmatprep.mubr.bf16.mxu0 0
    %1281 = vmatmul.mubr.bf16.gmra.mxu0 %v1246
    %v1282 = vpop.f32.mrf.mxu0
    %v1283 = vadd.f32 0.0, %v1282
    %v1284 = vpop.f32.mrf.mxu0
    %v1285 = vpop.f32.mrf.mxu0
    %v1286 = vadd.f32 0.0, %v1285
    %v1287 = vpop.f32.mrf.mxu0
    %1288 = vdwg.mxu0
    %v1289 = vpack.c.bf16 %v1286, %v1283
    %s1290 = scalar_lea.vmem %s6, 64
    %v1291 = vld [vmem:[%s1290] sm:$0xf]
    %v1292 = vld [vmem:[%s1290 + $0x4] sm:$0xf]
    %v1293 = vld [vmem:[%s1290 + $0x8] sm:$0xf]
    %v1294 = vld [vmem:[%s1290 + $0xc] sm:$0xf]
    %v1295 = vld [vmem:[%s1290 + $0x10] sm:$0xf]
    %v1296 = vld [vmem:[%s1290 + $0x14] sm:$0xf]
    %v1297 = vld [vmem:[%s1290 + $0x18] sm:$0xf]
    %v1298 = vld [vmem:[%s1290 + $0x1c] sm:$0xf]
    %v1299 = vld [vmem:[%s1290 + $0x20] sm:$0xf]
    %v1300 = vld [vmem:[%s1290 + $0x24] sm:$0xf]
    %v1301 = vld [vmem:[%s1290 + $0x28] sm:$0xf]
    %v1302 = vld [vmem:[%s1290 + $0x2c] sm:$0xf]
    %v1303 = vld [vmem:[%s1290 + $0x30] sm:$0xf]
    %v1304 = vld [vmem:[%s1290 + $0x34] sm:$0xf]
    %v1305 = vld [vmem:[%s1290 + $0x38] sm:$0xf]
    %v1306 = vld [vmem:[%s1290 + $0x3c] sm:$0xf]
    %s1307 = scalar_lea.vmem %s7, 1
    %v1308 = vld [vmem:[%s1307] sm:$0x1]
    %v1310 = vlaneseq
    %v1311 = vshrl.u32 %v1310, 7
    %v1312 = vsub.s32 0, %v1311
    %v1313 = vrot.slane %v1308, %v1312
    %v1331 = vunpack.c.l.b16 %v1291
    %v1332 = vunpack.c.l.b16 %v1292
    %v1333 = vunpack.c.l.b16 %v1293
    %v1334 = vunpack.c.l.b16 %v1294
    %v1335 = vunpack.c.l.b16 %v1295
    %v1336 = vunpack.c.l.b16 %v1296
    %v1337 = vunpack.c.l.b16 %v1297
    %v1338 = vunpack.c.l.b16 %v1298
    %v1339 = vunpack.c.l.b16 %v1299
    %v1340 = vunpack.c.l.b16 %v1300
    %v1341 = vunpack.c.l.b16 %v1301
    %v1342 = vunpack.c.l.b16 %v1302
    %v1343 = vunpack.c.l.b16 %v1303
    %v1344 = vunpack.c.l.b16 %v1304
    %v1345 = vunpack.c.l.b16 %v1305
    %v1346 = vunpack.c.l.b16 %v1306
    %v1347 = vpack.c.b16 %v1332, %v1331
    %v1348 = vpack.c.b16 %v1334, %v1333
    %v1349 = vpack.c.b16 %v1336, %v1335
    %v1350 = vpack.c.b16 %v1338, %v1337
    %v1351 = vpack.c.b16 %v1340, %v1339
    %v1352 = vpack.c.b16 %v1342, %v1341
    %v1353 = vpack.c.b16 %v1344, %v1343
    %v1354 = vpack.c.b16 %v1346, %v1345
    %1363 = vmatprep.subr.bf16.mxu0 0
    %1364 = vmatpush1.bf16.msra.mxu0 %v1354
    %1365 = vmatprep.subr.bf16.mxu0 0
    %1366 = vmatpush1.bf16.msra.mxu0 %v1353
    %1367 = vmatprep.subr.bf16.mxu0 0
    %1368 = vmatpush1.bf16.msra.mxu0 %v1352
    %1369 = vmatprep.subr.bf16.mxu0 0
    %1370 = vmatpush1.bf16.msra.mxu0 %v1351
    %1371 = vmatprep.subr.bf16.mxu0 0
    %1372 = vmatpush1.bf16.msra.mxu0 %v1350
    %1373 = vmatprep.subr.bf16.mxu0 0
    %1374 = vmatpush1.bf16.msra.mxu0 %v1349
    %1375 = vmatprep.subr.bf16.mxu0 0
    %1376 = vmatpush1.bf16.msra.mxu0 %v1348
    %1377 = vmatprep.subr.bf16.mxu0 0
    %1378 = vmatpush1.bf16.msra.mxu0 %v1347
    %1379 = vmatprep.subr.bf16.mxu0 0
    %1380 = vmatpush2.bf16.msra.mxu0 0
    %1381 = vmatprep.subr.bf16.mxu0 0
    %1382 = vmatpush2.bf16.msra.mxu0 0
    %1383 = vmatprep.subr.bf16.mxu0 0
    %1384 = vmatpush2.bf16.msra.mxu0 0
    %1385 = vmatprep.subr.bf16.mxu0 0
    %1386 = vmatpush2.bf16.msra.mxu0 0
    %1387 = vmatprep.subr.bf16.mxu0 0
    %1388 = vmatpush2.bf16.msra.mxu0 0
    %1389 = vmatprep.subr.bf16.mxu0 0
    %1390 = vmatpush2.bf16.msra.mxu0 0
    %1391 = vmatprep.subr.bf16.mxu0 0
    %1392 = vmatpush2.bf16.msra.mxu0 0
    %1393 = vmatprep.subr.bf16.mxu0 0
    %1394 = vmatpush2.bf16.msra.mxu0 0
    %1395 = vmatprep.mubr.bf16.mxu0 0
    %1396 = vmatmul.mubr.bf16.gmra.mxu0 %v1289
    %v1397 = vpop.f32.mrf.mxu0
    %v1398 = vadd.f32 %v1313, %v1397
    %v1399 = vpop.f32.mrf.mxu0
    %v1400 = vpop.f32.mrf.mxu0
    %v1401 = vadd.f32 %v1313, %v1400
    %v1402 = vpop.f32.mrf.mxu0
    %1403 = vdwg.mxu0
    %v1404 = vadd.f32 %v942, %v1398
    %v1405 = vadd.f32 %v943, %v1401
    %s1406 = scalar_lea.vmem [#allocation7], 1
    %v1407 = vld [vmem:[%s1406] sm:$0x1]
    %s1408 = scalar_lea.vmem [#allocation8], 1
    %v1409 = vld [vmem:[%s1408] sm:$0x1]
    %v1410 = vsel %vm273, %v1404, 0.0
    %1411 = vadd.xlane.f32.xlu0 %v1410
    %v1412 = vpop.xlane.xlu0 %1411
    %v1413 = vsel %vm273, %v1405, 0.0
    %1414 = vadd.xlane.f32.xlu0 %v1413
    %v1415 = vpop.xlane.xlu0 %1414
    %v1416 = vmul.f32 %v1412, %v707
    %v1417 = vmul.f32 %v1415, %v707
    %v1418 = vsub.f32 %v1404, %v1416
    %v1419 = vsub.f32 %v1405, %v1417
    %v1420 = vmul.f32 %v1418, %v1418
    %v1421 = vmul.f32 %v1419, %v1419
    %v1422 = vsel %vm273, %v1420, 0.0
    %1423 = vadd.xlane.f32.xlu0 %v1422
    %v1424 = vpop.xlane.xlu0 %1423
    %v1425 = vsel %vm273, %v1421, 0.0
    %1426 = vadd.xlane.f32.xlu0 %v1425
    %v1427 = vpop.xlane.xlu0 %1426
    %v1428 = vmul.f32 %v1424, %v707
    %v1429 = vmul.f32 %v1427, %v707
    %v1430 = vadd.f32 %v1428, 1e-05
    %v1431 = vadd.f32 %v1429, 1e-05
    %v1432 = vrsqrt.pop %v1430
    %v1433 = vrsqrt.pop %v1431
    %v1434 = vmul.f32 %v1418, %v1432
    %v1435 = vmul.f32 %v1419, %v1433
    %v1437 = vlaneseq
    %v1438 = vshrl.u32 %v1437, 7
    %v1439 = vsub.s32 0, %v1438
    %v1440 = vrot.slane %v1407, %v1439
    %v1442 = vmul.f32 %v1434, %v1440
    %v1443 = vmul.f32 %v1435, %v1440
    %v1445 = vlaneseq
    %v1446 = vshrl.u32 %v1445, 7
    %v1447 = vsub.s32 0, %v1446
    %v1448 = vrot.slane %v1409, %v1447
    %v1450 = vadd.f32 %v1442, %v1448
    %v1451 = vadd.f32 %v1443, %v1448
    %v1452 = vpack.c.bf16 %v1451, %v1450
    %s1453 = scalar_lea.vmem %s10, 16
    %v1454 = vld [vmem:[%s1453] sm:$0xf]
    %v1455 = vld [vmem:[%s1453 + $0x4] sm:$0xf]
    %v1456 = vld [vmem:[%s1453 + $0x8] sm:$0xf]
    %v1457 = vld [vmem:[%s1453 + $0xc] sm:$0xf]
    %s1458 = scalar_lea.vmem [#allocation10], 1
    %v1459 = vld [vmem:[%s1458] sm:$0x1]
    %v1461 = vlaneseq
    %v1462 = vshrl.u32 %v1461, 7
    %v1463 = vsub.s32 0, %v1462
    %v1464 = vrot.slane %v1459, %v1463
    %v1470 = vunpack.c.l.b16 %v1454
    %v1471 = vunpack.c.l.b16 %v1455
    %v1472 = vunpack.c.l.b16 %v1456
    %v1473 = vunpack.c.l.b16 %v1457
    %v1474 = vpack.c.b16 %v1471, %v1470
    %v1475 = vpack.c.b16 %v1473, %v1472
    %v1479 = vsel %vm273, %v1452, 0
    %1481 = vmatprep.subr.bf16.mxu0 0
    %1482 = vmatpush1.bf16.msra.mxu0 0
    %1483 = vmatprep.subr.bf16.mxu0 0
    %1484 = vmatpush1.bf16.msra.mxu0 0
    %1485 = vmatprep.subr.bf16.mxu0 0
    %1486 = vmatpush1.bf16.msra.mxu0 0
    %1487 = vmatprep.subr.bf16.mxu0 0
    %1488 = vmatpush1.bf16.msra.mxu0 0
    %1489 = vmatprep.subr.bf16.mxu0 0
    %1490 = vmatpush1.bf16.msra.mxu0 0
    %1491 = vmatprep.subr.bf16.mxu0 0
    %1492 = vmatpush1.bf16.msra.mxu0 0
    %1493 = vmatprep.subr.bf16.mxu0 0
    %1494 = vmatpush1.bf16.msra.mxu0 %v1475
    %1495 = vmatprep.subr.bf16.mxu0 0
    %1496 = vmatpush1.bf16.msra.mxu0 %v1474
    %1497 = vmatprep.subr.bf16.mxu0 0
    %1498 = vmatpush2.bf16.msra.mxu0 0
    %1499 = vmatprep.subr.bf16.mxu0 0
    %1500 = vmatpush2.bf16.msra.mxu0 0
    %1501 = vmatprep.subr.bf16.mxu0 0
    %1502 = vmatpush2.bf16.msra.mxu0 0
    %1503 = vmatprep.subr.bf16.mxu0 0
    %1504 = vmatpush2.bf16.msra.mxu0 0
    %1505 = vmatprep.subr.bf16.mxu0 0
    %1506 = vmatpush2.bf16.msra.mxu0 0
    %1507 = vmatprep.subr.bf16.mxu0 0
    %1508 = vmatpush2.bf16.msra.mxu0 0
    %1509 = vmatprep.subr.bf16.mxu0 0
    %1510 = vmatpush2.bf16.msra.mxu0 0
    %1511 = vmatprep.subr.bf16.mxu0 0
    %1512 = vmatpush2.bf16.msra.mxu0 0
    %1513 = vmatprep.mubr.bf16.mxu0 0
    %1514 = vmatmul.mubr.bf16.gmra.mxu0 %v1479
    %v1515 = vpop.f32.mrf.mxu0
    %v1516 = vadd.f32 %v1464, %v1515
    %v1517 = vpop.f32.mrf.mxu0
    %v1518 = vpop.f32.mrf.mxu0
    %v1519 = vadd.f32 %v1464, %v1518
    %v1520 = vpop.f32.mrf.mxu0
    %1521 = vdwg.mxu0
    %v1522 = vmax.f32 %v1516, 0.0
    %v1523 = vmax.f32 %v1519, 0.0
    %v1524 = vpack.c.bf16 %v1523, %v1522
    %s1525 = scalar_lea.vmem %s12, 32
    %v1526 = vld [vmem:[%s1525] sm:$0xf]
    %v1527 = vld [vmem:[%s1525 + $0x4] sm:$0xf]
    %v1528 = vld [vmem:[%s1525 + $0x8] sm:$0xf]
    %v1529 = vld [vmem:[%s1525 + $0xc] sm:$0xf]
    %v1530 = vld [vmem:[%s1525 + $0x10] sm:$0xf]
    %v1531 = vld [vmem:[%s1525 + $0x14] sm:$0xf]
    %v1532 = vld [vmem:[%s1525 + $0x18] sm:$0xf]
    %v1533 = vld [vmem:[%s1525 + $0x1c] sm:$0xf]
    %s1534 = scalar_lea.vmem [#allocation11], 1
    %v1535 = vld [vmem:[%s1534] sm:$0x1]
    %v1537 = vlaneseq
    %v1538 = vshrl.u32 %v1537, 7
    %v1539 = vsub.s32 0, %v1538
    %v1540 = vrot.slane %v1535, %v1539
    %v1550 = vunpack.c.l.b16 %v1526
    %v1551 = vunpack.c.l.b16 %v1527
    %v1552 = vunpack.c.l.b16 %v1528
    %v1553 = vunpack.c.l.b16 %v1529
    %v1554 = vunpack.c.l.b16 %v1530
    %v1555 = vunpack.c.l.b16 %v1531
    %v1556 = vunpack.c.l.b16 %v1532
    %v1557 = vunpack.c.l.b16 %v1533
    %v1558 = vpack.c.b16 %v1551, %v1550
    %v1559 = vpack.c.b16 %v1553, %v1552
    %v1560 = vpack.c.b16 %v1555, %v1554
    %v1561 = vpack.c.b16 %v1557, %v1556
    %v1567 = vsel %vm441, %v1524, 0
    %1569 = vmatprep.subr.bf16.mxu0 0
    %1570 = vmatpush1.bf16.msra.mxu0 0
    %1571 = vmatprep.subr.bf16.mxu0 0
    %1572 = vmatpush1.bf16.msra.mxu0 0
    %1573 = vmatprep.subr.bf16.mxu0 0
    %1574 = vmatpush1.bf16.msra.mxu0 0
    %1575 = vmatprep.subr.bf16.mxu0 0
    %1576 = vmatpush1.bf16.msra.mxu0 0
    %1577 = vmatprep.subr.bf16.mxu0 0
    %1578 = vmatpush1.bf16.msra.mxu0 %v1561
    %1579 = vmatprep.subr.bf16.mxu0 0
    %1580 = vmatpush1.bf16.msra.mxu0 %v1560
    %1581 = vmatprep.subr.bf16.mxu0 0
    %1582 = vmatpush1.bf16.msra.mxu0 %v1559
    %1583 = vmatprep.subr.bf16.mxu0 0
    %1584 = vmatpush1.bf16.msra.mxu0 %v1558
    %1585 = vmatprep.subr.bf16.mxu0 0
    %1586 = vmatpush2.bf16.msra.mxu0 0
    %1587 = vmatprep.subr.bf16.mxu0 0
    %1588 = vmatpush2.bf16.msra.mxu0 0
    %1589 = vmatprep.subr.bf16.mxu0 0
    %1590 = vmatpush2.bf16.msra.mxu0 0
    %1591 = vmatprep.subr.bf16.mxu0 0
    %1592 = vmatpush2.bf16.msra.mxu0 0
    %1593 = vmatprep.subr.bf16.mxu0 0
    %1594 = vmatpush2.bf16.msra.mxu0 0
    %1595 = vmatprep.subr.bf16.mxu0 0
    %1596 = vmatpush2.bf16.msra.mxu0 0
    %1597 = vmatprep.subr.bf16.mxu0 0
    %1598 = vmatpush2.bf16.msra.mxu0 0
    %1599 = vmatprep.subr.bf16.mxu0 0
    %1600 = vmatpush2.bf16.msra.mxu0 0
    %1601 = vmatprep.mubr.bf16.mxu0 0
    %1602 = vmatmul.mubr.bf16.gmra.mxu0 %v1567
    %v1603 = vpop.f32.mrf.mxu0
    %v1604 = vadd.f32 %v1540, %v1603
    %v1605 = vpop.f32.mrf.mxu0
    %v1606 = vpop.f32.mrf.mxu0
    %v1607 = vadd.f32 %v1540, %v1606
    %v1608 = vpop.f32.mrf.mxu0
    %1609 = vdwg.mxu0
    %v1610 = vadd.f32 %v1450, %v1604
    %v1611 = vadd.f32 %v1451, %v1607
    %s1612 = scalar_lea.vmem [#allocation13], 1
    %v1613 = vld [vmem:[%s1612] sm:$0x1]
    %s1614 = scalar_lea.vmem [#allocation14], 1
    %v1615 = vld [vmem:[%s1614] sm:$0x1]
    %v1616 = vsel %vm273, %v1610, 0.0
    %1617 = vadd.xlane.f32.xlu0 %v1616
    %v1618 = vpop.xlane.xlu0 %1617
    %v1619 = vsel %vm273, %v1611, 0.0
    %1620 = vadd.xlane.f32.xlu0 %v1619
    %v1621 = vpop.xlane.xlu0 %1620
    %v1622 = vmul.f32 %v1618, %v707
    %v1623 = vmul.f32 %v1621, %v707
    %v1624 = vsub.f32 %v1610, %v1622
    %v1625 = vsub.f32 %v1611, %v1623
    %v1626 = vmul.f32 %v1624, %v1624
    %v1627 = vmul.f32 %v1625, %v1625
    %v1628 = vsel %vm273, %v1626, 0.0
    %1629 = vadd.xlane.f32.xlu0 %v1628
    %v1630 = vpop.xlane.xlu0 %1629
    %v1631 = vsel %vm273, %v1627, 0.0
    %1632 = vadd.xlane.f32.xlu0 %v1631
    %v1633 = vpop.xlane.xlu0 %1632
    %v1634 = vmul.f32 %v1630, %v707
    %v1635 = vmul.f32 %v1633, %v707
    %v1636 = vadd.f32 %v1634, 1e-05
    %v1637 = vadd.f32 %v1635, 1e-05
    %v1638 = vrsqrt.pop %v1636
    %v1639 = vrsqrt.pop %v1637
    %v1640 = vmul.f32 %v1624, %v1638
    %v1641 = vmul.f32 %v1625, %v1639
    %v1643 = vlaneseq
    %v1644 = vshrl.u32 %v1643, 7
    %v1645 = vsub.s32 0, %v1644
    %v1646 = vrot.slane %v1613, %v1645
    %v1648 = vmul.f32 %v1640, %v1646
    %v1649 = vmul.f32 %v1641, %v1646
    %v1651 = vlaneseq
    %v1652 = vshrl.u32 %v1651, 7
    %v1653 = vsub.s32 0, %v1652
    %v1654 = vrot.slane %v1615, %v1653
    %v1656 = vadd.f32 %v1648, %v1654
    %v1657 = vadd.f32 %v1649, %v1654
    %v1658 = vpack.c.bf16 %v1657, %v1656
    %v1659 = vld [vmem:[#allocation16] sm:$0xf]
    %v1660 = vld [vmem:[#allocation16 + $0x4] sm:$0xf]
    %v1661 = vld [vmem:[#allocation16 + $0x8] sm:$0xf]
    %v1662 = vld [vmem:[#allocation16 + $0xc] sm:$0xf]
    %v1663 = vld [vmem:[#allocation17] sm:$0x1]
    %v1665 = vlaneseq
    %v1666 = vshrl.u32 %v1665, 7
    %v1667 = vsub.s32 0, %v1666
    %v1668 = vrot.slane %v1663, %v1667
    %v1674 = vunpack.c.l.b16 %v1659
    %v1675 = vunpack.c.l.b16 %v1660
    %v1676 = vunpack.c.l.b16 %v1661
    %v1677 = vunpack.c.l.b16 %v1662
    %v1678 = vpack.c.b16 %v1675, %v1674
    %v1679 = vpack.c.b16 %v1677, %v1676
    %v1683 = vsel %vm273, %v1658, 0
    %1685 = vmatprep.subr.bf16.mxu0 0
    %1686 = vmatpush1.bf16.msra.mxu0 0
    %1687 = vmatprep.subr.bf16.mxu0 0
    %1688 = vmatpush1.bf16.msra.mxu0 0
    %1689 = vmatprep.subr.bf16.mxu0 0
    %1690 = vmatpush1.bf16.msra.mxu0 0
    %1691 = vmatprep.subr.bf16.mxu0 0
    %1692 = vmatpush1.bf16.msra.mxu0 0
    %1693 = vmatprep.subr.bf16.mxu0 0
    %1694 = vmatpush1.bf16.msra.mxu0 0
    %1695 = vmatprep.subr.bf16.mxu0 0
    %1696 = vmatpush1.bf16.msra.mxu0 0
    %1697 = vmatprep.subr.bf16.mxu0 0
    %1698 = vmatpush1.bf16.msra.mxu0 %v1679
    %1699 = vmatprep.subr.bf16.mxu0 0
    %1700 = vmatpush1.bf16.msra.mxu0 %v1678
    %1701 = vmatprep.subr.bf16.mxu0 0
    %1702 = vmatpush2.bf16.msra.mxu0 0
    %1703 = vmatprep.subr.bf16.mxu0 0
    %1704 = vmatpush2.bf16.msra.mxu0 0
    %1705 = vmatprep.subr.bf16.mxu0 0
    %1706 = vmatpush2.bf16.msra.mxu0 0
    %1707 = vmatprep.subr.bf16.mxu0 0
    %1708 = vmatpush2.bf16.msra.mxu0 0
    %1709 = vmatprep.subr.bf16.mxu0 0
    %1710 = vmatpush2.bf16.msra.mxu0 0
    %1711 = vmatprep.subr.bf16.mxu0 0
    %1712 = vmatpush2.bf16.msra.mxu0 0
    %1713 = vmatprep.subr.bf16.mxu0 0
    %1714 = vmatpush2.bf16.msra.mxu0 0
    %1715 = vmatprep.subr.bf16.mxu0 0
    %1716 = vmatpush2.bf16.msra.mxu0 0
    %1717 = vmatprep.mubr.bf16.mxu0 0
    %1718 = vmatmul.mubr.bf16.gmra.mxu0 %v1683
    %v1719 = vpop.f32.mrf.mxu0
    %v1720 = vadd.f32 %v1668, %v1719
    %v1721 = vpop.f32.mrf.mxu0
    %v1722 = vpop.f32.mrf.mxu0
    %v1723 = vadd.f32 %v1668, %v1722
    %v1724 = vpop.f32.mrf.mxu0
    %1725 = vdwg.mxu0
    %1726 = vst [vmem:[#allocation19] sm:$0xff] %v1720
    %1727 = vst [vmem:[#allocation19 + $0x8] sm:$0xff] %v1723
    // Predicated region
    $region114: #{my_transformer_forward.1} parent=1 // pred_check
      _
    $region115: #{my_transformer_forward.1} parent=1 // pred_check_branch
      %1729 = sbr.rel (0) target = $region117
    $region116: #{my_transformer_forward.1} parent=1 // pred_region
      %s1731 = ssub.s32 256, 256
      %1732 = vsyncadd [#allocation4], %s1731
      %s1733 = sshll.u32 [#allocation19], 4
      %s1734 = int_to_ptr.vmem [resolvable:$true] %s1733
      %1739 = dma.vmem_to_hbm [thread:$0]  %s1734, 256, %s18, [#allocation4], 128, 128, 8
    $region117: #{my_transformer_forward.1} parent=1 // pred_fallthru
      _
    // Predicated region
    $region118: #{my_transformer_forward.1} parent=1 // pred_check
      _
    $region119: #{my_transformer_forward.1} parent=1 // pred_check_branch
      %1741 = sbr.rel (0) target = $region121
    $region120: #{my_transformer_forward.1} parent=1 // pred_region
      %1742 = dma.done [#allocation4], 256
    $region121: #{my_transformer_forward.1} parent=1 // pred_fallthru
      _
    %1743 = vsyncpa [#allocation3], 1
    %1744 = vsyncpa [#allocation6], 1
    %1745 = vsyncpa [#allocation9], 1
    %1746 = vsyncpa [#allocation12], 1
    %1747 = vsyncpa [#allocation15], 1
    %1748 = vsyncpa [#allocation18], 1
    %1749 = vsyncpa [#allocation4], 1

</llo_original>
